<compile_context>
chip_gen: v6e
topology: v6e:2x2x1
jax: 0.10.0
libtpu: 0.0.40
codegen_flags: <defaults>
</compile_context>

<pallas_src>
import functools

import numpy as np
import jax
import jax.numpy as jnp
from jax import lax
from jax.experimental import pallas as pl
from jax.experimental.pallas import tpu as pltpu


def _vmem_capacity_bytes():
    """Physical VMEM per TensorCore; conservative fallback if unqueryable."""
    try:
        cap = getattr(pltpu.get_tpu_info(), "vmem_capacity_bytes", None)
        if cap:
            return int(cap)
    except Exception:
        pass
    return 64 * 1024 * 1024   # v7x-sized conservative default


def _pick_row_tile(N, C, Ho, Wo, k, W, in_isz, out_isz, budget):
    """Largest output-row tile (multiple of 8 sublanes) whose pipelined VMEM
    footprint fits `budget`, while keeping >= 8 grid blocks when possible so
    both v7x TensorCores stay fed (harmless on single-TC v5e/v6e)."""
    kW = k * W

    def footprint(rho):
        x_blk = C * rho * kW * in_isz        # input block (double buffered)
        o_blk = C * rho * Wo * out_isz       # output block (double buffered)
        sel = (k + 1) * W * Wo * 4           # selection / window-sum matrices
        tmp = 4 * C * rho * W * 4            # f32 mx/sm/matmul temporaries
        return 2 * x_blk + 2 * o_blk + 2 * sel + tmp + (256 << 10)

    if Ho <= 8:
        return Ho
    best = 8
    rho = 16
    while rho <= (Ho // 8) * 8:
        if footprint(rho) > budget:
            break
        if N * pl.cdiv(Ho, rho) < 8:         # keep both v7x cores busy
            break
        best = rho
        rho += 8
    return best


def _mixpool_kernel(w_ref, b_ref, sel_ref, x_ref, o_ref, *, k, w_in, wo, inv_k2):
    c, rho, _ = x_ref.shape

    # ---- window-row (dy) reduce: k contiguous lane slices of width W ------
    band0 = x_ref[:, :, 0:w_in]                      # (C, Rho, W), input dtype
    mx = band0                                       # max stays in input dtype
    sm = band0.astype(jnp.float32)                   # f32 sum accumulator
    for d in range(1, k):
        band = x_ref[:, :, d * w_in:(d + 1) * w_in]
        mx = jnp.maximum(mx, band)
        sm = sm + band.astype(jnp.float32)

    dot = functools.partial(jnp.dot, preferred_element_type=jnp.float32,
                            precision=lax.Precision.HIGHEST)

    # ---- window-column (dx) reduce: exact one-hot / window-sum matmuls -----
    mx2 = mx.astype(jnp.float32).reshape(c * rho, w_in)
    sm2 = sm.reshape(c * rho, w_in)
    mx_p = dot(mx2, sel_ref[0])                      # (C*Rho, Wo)
    for d in range(1, k):
        mx_p = jnp.maximum(mx_p, dot(mx2, sel_ref[d]))
    avg_p = dot(sm2, sel_ref[k]) * inv_k2            # (C*Rho, Wo)

    # ---- gate: 1x1 conv at each window's top-left pixel, exact sigmoid -----
    t = jnp.sum(band0.astype(jnp.float32) * w_ref[...], axis=0)   # (Rho, W)
    logit = dot(t, sel_ref[0]) + b_ref[0]                          # (Rho, Wo)
    alpha = 1.0 / (1.0 + jnp.exp(-logit))

    # ---- blend: alpha*max + (1-alpha)*avg == avg + alpha*(max-avg) ---------
    mx3 = mx_p.reshape(c, rho, wo)
    av3 = avg_p.reshape(c, rho, wo)
    o_ref[...] = (av3 + alpha[None, :, :] * (mx3 - av3)).astype(o_ref.dtype)


def adaptive_mix_pool(x, gate_w, gate_b, *, kernel_size, stride, padding):
    # TODO(synk): fast path assumes non-overlapping, unpadded pooling
    # (kernel_size == stride, padding == 0, H % k == W % k == 0); general
    # overlapping / padded pooling needs -inf / zero halos and a different
    # gate-resize mapping.
    assert kernel_size == stride and padding == 0
    N, C, H, W = x.shape
    k = kernel_size
    assert H % k == 0 and W % k == 0
    Ho, Wo = H // k, W // k
    kW = k * W

    # Free bitcast (no HBM traffic): every row of the last axis is the full
    # k x W pixel band feeding one pooled output row.
    xb = x.reshape(N, C, Ho, kW)

    # One-hot column-selection matrices SEL[d][j*k+d, j] = 1 (d = 0..k-1) and
    # the window column-sum matrix SEL[k] = sum_d SEL[d].  Used to compact the
    # lane axis W -> Wo exactly on the MXU.
    sel = np.zeros((k + 1, W, Wo), np.float32)
    cols = np.arange(Wo)
    for d in range(k):
        sel[d, cols * k + d, cols] = 1.0
    sel[k] = sel[:k].sum(axis=0)
    sel = jnp.asarray(sel)

    w3 = gate_w.reshape(C, 1, 1).astype(jnp.float32)
    b1 = gate_b.reshape(1).astype(jnp.float32)

    cap = _vmem_capacity_bytes()
    budget = max(32 * 1024 * 1024, (3 * cap) // 4)   # ~48 MiB v7x, ~96 MiB v5e/v6e
    rho = _pick_row_tile(N, C, Ho, Wo, k, W, x.dtype.itemsize,
                         x.dtype.itemsize, budget)
    # TODO(synk): add a channel grid axis (with a cross-tile gate-logit
    # accumulator) for very large C where even rho == 8 exceeds the budget.
    # TODO(synk): consider pipeline_mode=pl.Buffered(3) on the input spec for
    # very small per-step blocks on v7x.

    kernel = functools.partial(_mixpool_kernel, k=k, w_in=W, wo=Wo,
                               inv_k2=1.0 / (k * k))

    out = pl.pallas_call(
        kernel,
        out_shape=jax.ShapeDtypeStruct((N, C, Ho, Wo), x.dtype),
        grid=(N, pl.cdiv(Ho, rho)),
        in_specs=[
            pl.BlockSpec((C, 1, 1), lambda n, h: (0, 0, 0)),
            pl.BlockSpec(memory_space=pltpu.MemorySpace.SMEM),
            pl.BlockSpec((k + 1, W, Wo), lambda n, h: (0, 0, 0)),
            pl.BlockSpec((None, C, rho, kW), lambda n, h: (n, 0, h, 0)),
        ],
        out_specs=pl.BlockSpec((None, C, rho, Wo), lambda n, h: (n, 0, h, 0)),
        compiler_params=pltpu.CompilerParams(
            dimension_semantics=("parallel", "parallel"),
            vmem_limit_bytes=int(budget)),
    )(w3, b1, sel, xb)

    return out


def ref_forward(x, w, b, k):
    """Pure-JAX reference matching the PyTorch forward exactly."""
    N, C, H, W = x.shape
    logit = jnp.einsum("nchw,c->nhw", x, w)[:, None, :, :] + b
    alpha = jax.nn.sigmoid(logit)
    xw = x.reshape(N, C, H // k, k, W // k, k)
    max_p = xw.max(axis=(3, 5))
    avg_p = xw.mean(axis=(3, 5))
    a = alpha[:, :, ::k, ::k]                # nearest-resize for integer factor
    return a * max_p + (1.0 - a) * avg_p


if __name__ == "__main__":
    key = jax.random.PRNGKey(0)
    configs = [
        # (N, C, H, W, kernel_size)
        (2, 4, 16, 16, 2),
        (2, 8, 24, 24, 3),
    ]
    for N, C, H, W, k in configs:
        key, kx, kw, kb = jax.random.split(key, 4)
        x = jax.random.normal(kx, (N, C, H, W), dtype=jnp.float32)
        # nn.Conv2d(C, 1, kernel_size=1): weight (1, C, 1, 1) -> (C,), bias (1,)
        bound = 1.0 / (C ** 0.5)
        gate_w = jax.random.uniform(kw, (C,), minval=-bound, maxval=bound,
                                    dtype=jnp.float32)
        gate_b = jax.random.uniform(kb, (1,), minval=-bound, maxval=bound,
                                    dtype=jnp.float32)

        mix = jax.jit(functools.partial(adaptive_mix_pool, kernel_size=k,
                                        stride=k, padding=0))
        out = jax.block_until_ready(mix(x, gate_w, gate_b))
        assert out.shape == (N, C, H // k, W // k)

        ref = ref_forward(x, gate_w, gate_b[0], k)
        err = float(jnp.max(jnp.abs(out - ref)))
        # Exact sigmoid + HIGHEST-precision selection matmuls -> tight tolerance.
        assert jnp.allclose(out, ref, atol=1e-4, rtol=1e-4), err

    print("KERNEL_OK")
</pallas_src>

<mosaic_0001>
module attributes {stable_mosaic.version = 11 : i64} {
  func.func @_mixpool_kernel(%arg0: i32, %arg1: i32, %arg2: memref<4x1x1xf32, #tpu.memory_space<vmem>>, %arg3: memref<1xf32, #tpu.memory_space<smem>>, %arg4: memref<3x16x8xf32, #tpu.memory_space<vmem>>, %arg5: memref<1x4x8x32xf32, #tpu.memory_space<vmem>>, %arg6: memref<1x4x8x8xf32, #tpu.memory_space<vmem>>) attributes {dimension_semantics = [#tpu.dimension_semantics<parallel>, #tpu.dimension_semantics<parallel>], iteration_bounds = array<i64: 2, 1>, scalar_prefetch = 0 : i64, scratch_operands = 0 : i64, tpu.core_type = #tpu.core_type<tc>, window_params = [{pipeline_mode = #tpu.pipeline_mode<synchronous>, transform_indices = @transform_0, window_bounds = array<i64: 4, 1, 1>}, {transform_indices = @transform_1, window_bounds = array<i64: 1>}, {pipeline_mode = #tpu.pipeline_mode<synchronous>, transform_indices = @transform_2, window_bounds = array<i64: 3, 16, 8>}, {transform_indices = @transform_3, window_bounds = array<i64: 1, 4, 8, 32>}, {transform_indices = @transform_4, window_bounds = array<i64: 1, 4, 8, 8>}]} {
    %c0 = arith.constant 0 : index
    %c0_0 = arith.constant 0 : index
    %c0_1 = arith.constant 0 : index
    %c0_2 = arith.constant 0 : index
    %0 = vector.load %arg5[%c0, %c0_0, %c0_1, %c0_2] : memref<1x4x8x32xf32, #tpu.memory_space<vmem>>, vector<1x4x8x16xf32>
    %1 = vector.shape_cast %0 : vector<1x4x8x16xf32> to vector<4x8x16xf32>
    %c0_3 = arith.constant 0 : index
    %c0_4 = arith.constant 0 : index
    %c0_5 = arith.constant 0 : index
    %c16 = arith.constant 16 : index
    %2 = vector.load %arg5[%c0_3, %c0_4, %c0_5, %c16] : memref<1x4x8x32xf32, #tpu.memory_space<vmem>>, vector<1x4x8x16xf32>
    %3 = vector.shape_cast %2 : vector<1x4x8x16xf32> to vector<4x8x16xf32>
    %4 = arith.maximumf %1, %3 : vector<4x8x16xf32>
    %5 = arith.addf %1, %3 : vector<4x8x16xf32>
    %6 = vector.shape_cast %4 : vector<4x8x16xf32> to vector<32x16xf32>
    %7 = vector.shape_cast %5 : vector<4x8x16xf32> to vector<32x16xf32>
    %c0_6 = arith.constant 0 : index
    %c0_7 = arith.constant 0 : index
    %c0_8 = arith.constant 0 : index
    %8 = vector.load %arg4[%c0_6, %c0_7, %c0_8] : memref<3x16x8xf32, #tpu.memory_space<vmem>>, vector<1x16x8xf32>
    %9 = vector.shape_cast %8 : vector<1x16x8xf32> to vector<16x8xf32>
    %cst = arith.constant dense<0.000000e+00> : vector<32x8xf32>
    %10 = tpu.matmul %6, %9, %cst {dimension_numbers = #tpu.dot_dimension_numbers<[1], [0], [0], [1], [0, 0, 1, 1], [], []>, precision = #tpu.contract_precision<fp32>} : vector<32x16xf32>, vector<16x8xf32>, vector<32x8xf32> -> vector<32x8xf32>
    %c1 = arith.constant 1 : index
    %c0_9 = arith.constant 0 : index
    %c0_10 = arith.constant 0 : index
    %11 = vector.load %arg4[%c1, %c0_9, %c0_10] : memref<3x16x8xf32, #tpu.memory_space<vmem>>, vector<1x16x8xf32>
    %12 = vector.shape_cast %11 : vector<1x16x8xf32> to vector<16x8xf32>
    %cst_11 = arith.constant dense<0.000000e+00> : vector<32x8xf32>
    %13 = tpu.matmul %6, %12, %cst_11 {dimension_numbers = #tpu.dot_dimension_numbers<[1], [0], [0], [1], [0, 0, 1, 1], [], []>, precision = #tpu.contract_precision<fp32>} : vector<32x16xf32>, vector<16x8xf32>, vector<32x8xf32> -> vector<32x8xf32>
    %14 = arith.maximumf %10, %13 : vector<32x8xf32>
    %c2 = arith.constant 2 : index
    %c0_12 = arith.constant 0 : index
    %c0_13 = arith.constant 0 : index
    %15 = vector.load %arg4[%c2, %c0_12, %c0_13] : memref<3x16x8xf32, #tpu.memory_space<vmem>>, vector<1x16x8xf32>
    %16 = vector.shape_cast %15 : vector<1x16x8xf32> to vector<16x8xf32>
    %cst_14 = arith.constant dense<0.000000e+00> : vector<32x8xf32>
    %17 = tpu.matmul %7, %16, %cst_14 {dimension_numbers = #tpu.dot_dimension_numbers<[1], [0], [0], [1], [0, 0, 1, 1], [], []>, precision = #tpu.contract_precision<fp32>} : vector<32x16xf32>, vector<16x8xf32>, vector<32x8xf32> -> vector<32x8xf32>
    %cst_15 = arith.constant 2.500000e-01 : f32
    %18 = vector.broadcast %cst_15 : f32 to vector<32x8xf32>
    %19 = arith.mulf %17, %18 : vector<32x8xf32>
    %c0_16 = arith.constant 0 : index
    %c0_17 = arith.constant 0 : index
    %c0_18 = arith.constant 0 : index
    %20 = vector.load %arg2[%c0_16, %c0_17, %c0_18] : memref<4x1x1xf32, #tpu.memory_space<vmem>>, vector<4x1x1xf32>
    %21 = vector.broadcast %20 : vector<4x1x1xf32> to vector<4x8x16xf32>
    %22 = arith.mulf %1, %21 : vector<4x8x16xf32>
    %cst_19 = arith.constant dense<0.000000e+00> : vector<8x16xf32>
    %23 = vector.multi_reduction <add>, %22, %cst_19 [0] : vector<4x8x16xf32> to vector<8x16xf32>
    %c0_20 = arith.constant 0 : index
    %c0_21 = arith.constant 0 : index
    %c0_22 = arith.constant 0 : index
    %24 = vector.load %arg4[%c0_20, %c0_21, %c0_22] : memref<3x16x8xf32, #tpu.memory_space<vmem>>, vector<1x16x8xf32>
    %25 = vector.shape_cast %24 : vector<1x16x8xf32> to vector<16x8xf32>
    %cst_23 = arith.constant dense<0.000000e+00> : vector<8x8xf32>
    %26 = tpu.matmul %23, %25, %cst_23 {dimension_numbers = #tpu.dot_dimension_numbers<[1], [0], [0], [1], [0, 0, 1, 1], [], []>, precision = #tpu.contract_precision<fp32>} : vector<8x16xf32>, vector<16x8xf32>, vector<8x8xf32> -> vector<8x8xf32>
    %c0_24 = arith.constant 0 : index
    %27 = memref.load %arg3[%c0_24] : memref<1xf32, #tpu.memory_space<smem>>
    %28 = vector.broadcast %27 : f32 to vector<8x8xf32>
    %29 = arith.addf %26, %28 : vector<8x8xf32>
    %cst_25 = arith.constant 0.000000e+00 : f32
    %30 = vector.broadcast %cst_25 : f32 to vector<8x8xf32>
    %31 = arith.subf %30, %29 : vector<8x8xf32>
    %32 = math.exp %31 : vector<8x8xf32>
    %cst_26 = arith.constant 1.000000e+00 : f32
    %33 = vector.broadcast %cst_26 : f32 to vector<8x8xf32>
    %34 = arith.addf %33, %32 : vector<8x8xf32>
    %cst_27 = arith.constant 1.000000e+00 : f32
    %35 = vector.broadcast %cst_27 : f32 to vector<8x8xf32>
    %36 = arith.divf %35, %34 : vector<8x8xf32>
    %37 = vector.shape_cast %14 : vector<32x8xf32> to vector<4x8x8xf32>
    %38 = vector.shape_cast %19 : vector<32x8xf32> to vector<4x8x8xf32>
    %39 = vector.shape_cast %36 : vector<8x8xf32> to vector<1x8x8xf32>
    %40 = arith.subf %37, %38 : vector<4x8x8xf32>
    %41 = vector.broadcast %39 : vector<1x8x8xf32> to vector<4x8x8xf32>
    %42 = arith.mulf %41, %40 : vector<4x8x8xf32>
    %43 = arith.addf %38, %42 : vector<4x8x8xf32>
    %c0_28 = arith.constant 0 : index
    %c0_29 = arith.constant 0 : index
    %c0_30 = arith.constant 0 : index
    %c0_31 = arith.constant 0 : index
    %44 = vector.load %arg6[%c0_28, %c0_29, %c0_30, %c0_31] : memref<1x4x8x8xf32, #tpu.memory_space<vmem>>, vector<1x4x8x8xf32>
    %45 = vector.shape_cast %44 : vector<1x4x8x8xf32> to vector<4x8x8xf32>
    %46 = vector.shape_cast %43 : vector<4x8x8xf32> to vector<1x4x8x8xf32>
    tpu.vector_store %arg6[%c0_28, %c0_29, %c0_30, %c0_31], %46 {strides = array<i32>} : memref<1x4x8x8xf32, #tpu.memory_space<vmem>>, vector<1x4x8x8xf32>,
    return
  }
  func.func @transform_0(%arg0: i32, %arg1: i32) -> (i32, i32, i32) {
    %c0_i32 = arith.constant 0 : i32
    %c0_i32_0 = arith.constant 0 : i32
    %c0_i32_1 = arith.constant 0 : i32
    %c0_i32_2 = arith.constant 0 : i32
    return %c0_i32, %c0_i32_0, %c0_i32_1 : i32, i32, i32
  }
  func.func @transform_1(%arg0: i32, %arg1: i32) -> i32 {
    %c0_i32 = arith.constant 0 : i32
    %c0_i32_0 = arith.constant 0 : i32
    return %c0_i32 : i32
  }
  func.func @transform_2(%arg0: i32, %arg1: i32) -> (i32, i32, i32) {
    %c0_i32 = arith.constant 0 : i32
    %c0_i32_0 = arith.constant 0 : i32
    %c0_i32_1 = arith.constant 0 : i32
    %c0_i32_2 = arith.constant 0 : i32
    return %c0_i32, %c0_i32_0, %c0_i32_1 : i32, i32, i32
  }
  func.func @transform_3(%arg0: i32, %arg1: i32) -> (i32, i32, i32, i32) {
    %c0_i32 = arith.constant 0 : i32
    %c0_i32_0 = arith.constant 0 : i32
    %c0_i32_1 = arith.constant 0 : i32
    return %arg0, %c0_i32, %arg1, %c0_i32_0 : i32, i32, i32, i32
  }
  func.func @transform_4(%arg0: i32, %arg1: i32) -> (i32, i32, i32, i32) {
    %c0_i32 = arith.constant 0 : i32
    %c0_i32_0 = arith.constant 0 : i32
    %c0_i32_1 = arith.constant 0 : i32
    return %arg0, %c0_i32, %arg1, %c0_i32_0 : i32, i32, i32, i32
  }
}

</mosaic_0001>

<llo_original>
// kernel: adaptive_mix_pool.1
$region0: #{adaptive_mix_pool.1}
  #allocation0 [shape = 'u32[]', space=smem, size = 0x4, offset = 0x4, fixed_abs, tag = 'smem constant byte address 0x4 - core index']
  #allocation1 [shape = 'u32[144,128]{1,0:T(1,128)}', space=vmem, size = 0x12000, scoped, tag = 'internal scratch']
  #allocation2 [shape = 'f32[1]{0:T(128)S(6)}', space=smem, size = 0x200, scoped, tag = 'scoped memory for adaptive_mix_pool.1']
  %s0 = inlined_call_operand.vmem [shape: f32[4,1,1], index: 0, kind: input, shape index: {}]
  %s1 = inlined_call_operand.<no memory space> [shape: f32[1], index: 1, kind: input, shape index: {}]
  %s2 = inlined_call_operand.vmem [shape: f32[3,16,8], index: 2, kind: input, shape index: {}]
  %s3 = inlined_call_operand.vmem [shape: f32[2,4,8,32], index: 3, kind: input, shape index: {}]
  %s4 = inlined_call_operand.hbm [shape: f32[2,4,8,8], index: 4, kind: output, shape index: {}]
  %s5 = sld [smem:[#allocation0]]
  $region49: #{adaptive_mix_pool.1} parent=0
    _
  %s7 = ssub.s32 1, %s5
  %s8 = scalar_select 0, %s7, %s5
  %9 = sst [smem:[#allocation2]] %s1
  $region1: #{adaptive_mix_pool.1} parent=0
    #allocation3 [shape = 'u8[32768]{0}', space=vmem, size = 0x8000, scoped, tag = 'output window, operand 0']
    #allocation4 [shape = 's32[2]{0}', space=sflag, size = 0x8, scoped, tag = 'scoped memory for adaptive_mix_pool.1']
    %10 = vsyncpa [#allocation4], 0
    %s11 = scalar_lea.sflag [#allocation4], 1
    %12 = vsyncpa %s11, 0
    loop: start=0, step=1, limit=4
    $region2: #{adaptive_mix_pool.1} parent=1 // loop_pre_header
      _
    $region3: #{adaptive_mix_pool.1} parent=1 // loop_header
      %s14 = sphi 0, %s18
      %p15 = scmp.ge.s32.totalorder %s14, 4
      %s21 = sphi 0, %s33
      %s22 = sphi 0, %s29
      %s23 = sphi 0, %s21
      %s24 = sphi 0, %s22
      %s25 = sphi 0, %s23
      %s26 = sphi 0, %s24
      %s34 = sphi 0, %s34
      %s36 = sphi 0, %s34
      %s37 = sphi 0, %s36
      %s51 = sphi 0, %s37
      %s55 = sphi 0, %s55
      %s57 = sphi 0, %s55
      %s58 = sphi 0, %s57
      %s72 = sphi 0, %s58
      %s76 = sphi 0, %s76
      %s78 = sphi 0, %s76
      %s79 = sphi 0, %s78
      %s93 = sphi 0, %s79
      %s101 = sphi 0, %s103
      %s104 = sphi 0, %s101
      %s105 = sphi 0, %s104
      %s121 = sphi 0, %s105
      %s129 = sphi 0, %s131
      %s132 = sphi 0, %s129
      %s133 = sphi 0, %s132
      %s149 = sphi 0, %s133
    $region4: #{adaptive_mix_pool.1} parent=1 // loop_header_branch
      %17 = sbr.rel (%p15) target = $region8
    $region5: #{adaptive_mix_pool.1} parent=1 // loop_body
      %s19 = ssub.s32 %s14, 1
      %s20 = ssub.s32 %s14, 2
      %s27 = sadd.s32 1, %s22
      %p28 = scmp.ge.s32.totalorder %s27, 1
      %s29 = scalar_select %p28, 0, %s27
      %s30 = sadd.s32 1, %s21
      %s31 = scalar_select %p28, %s30, %s21
      %p32 = scmp.ge.s32.totalorder %s31, 2
      %s33 = scalar_select %p32, 0, %s31
      %s35 = sadd.s32 %s34, 1
      %p38 = scmp.eq.s32.totalorder %s14, 1
      %p39 = scmp.ne.s32.totalorder %s34, %s36
      %p40 = scmp.eq.s32.totalorder %s14, 0
      %p41 = por %p39, %p40
      %p42 = scmp.ne.s32.totalorder %s34, %s36
      %p43 = scmp.eq.s32.totalorder %s19, 1
      %p44 = por %p42, %p43
      %p45 = scmp.ne.s32.totalorder %s36, %s37
      %p46 = scmp.eq.s32.totalorder %s19, 0
      %p47 = por %p45, %p46
      %p48 = scmp.ne.s32.totalorder %s36, %s37
      %p49 = scmp.eq.s32.totalorder %s20, 1
      %p50 = por %p48, %p49
      %p52 = scmp.ne.s32.totalorder %s37, %s51
      %p53 = scmp.eq.s32.totalorder %s20, 0
      %p54 = por %p52, %p53
      %s56 = sadd.s32 %s55, 1
      %p59 = scmp.eq.s32.totalorder %s14, 1
      %p60 = scmp.ne.s32.totalorder %s55, %s57
      %p61 = scmp.eq.s32.totalorder %s14, 0
      %p62 = por %p60, %p61
      %p63 = scmp.ne.s32.totalorder %s55, %s57
      %p64 = scmp.eq.s32.totalorder %s19, 1
      %p65 = por %p63, %p64
      %p66 = scmp.ne.s32.totalorder %s57, %s58
      %p67 = scmp.eq.s32.totalorder %s19, 0
      %p68 = por %p66, %p67
      %p69 = scmp.ne.s32.totalorder %s57, %s58
      %p70 = scmp.eq.s32.totalorder %s20, 1
      %p71 = por %p69, %p70
      %p73 = scmp.ne.s32.totalorder %s58, %s72
      %p74 = scmp.eq.s32.totalorder %s20, 0
      %p75 = por %p73, %p74
      %s77 = sadd.s32 %s76, 1
      %p80 = scmp.eq.s32.totalorder %s14, 1
      %p81 = scmp.ne.s32.totalorder %s76, %s78
      %p82 = scmp.eq.s32.totalorder %s14, 0
      %p83 = por %p81, %p82
      %p84 = scmp.ne.s32.totalorder %s76, %s78
      %p85 = scmp.eq.s32.totalorder %s19, 1
      %p86 = por %p84, %p85
      %p87 = scmp.ne.s32.totalorder %s78, %s79
      %p88 = scmp.eq.s32.totalorder %s19, 0
      %p89 = por %p87, %p88
      %p90 = scmp.ne.s32.totalorder %s78, %s79
      %p91 = scmp.eq.s32.totalorder %s20, 1
      %p92 = por %p90, %p91
      %p94 = scmp.ne.s32.totalorder %s79, %s93
      %p95 = scmp.eq.s32.totalorder %s20, 0
      %p96 = por %p94, %p95
      %s97 = ssub.s32 %s21, %s33
      %s98 = ssub.s32 %s22, %s29
      %s99 = sor.u32 %s97, %s98
      %p100 = scmp.eq.s32.totalorder %s99, 0
      %s102 = sadd.s32 %s101, 1
      %s103 = scalar_select %p100, %s101, %s102
      %p106 = pneg %p100
      %p107 = scmp.eq.s32.totalorder %s14, 1
      %p108 = por %p106, %p107
      %p109 = scmp.ne.s32.totalorder %s101, %s104
      %p110 = scmp.eq.s32.totalorder %s14, 0
      %p111 = por %p109, %p110
      %p112 = scmp.ne.s32.totalorder %s101, %s104
      %p113 = scmp.eq.s32.totalorder %s19, 1
      %p114 = por %p112, %p113
      %p115 = scmp.ne.s32.totalorder %s104, %s105
      %p116 = scmp.eq.s32.totalorder %s19, 0
      %p117 = por %p115, %p116
      %p118 = scmp.ne.s32.totalorder %s104, %s105
      %p119 = scmp.eq.s32.totalorder %s20, 1
      %p120 = por %p118, %p119
      %p122 = scmp.ne.s32.totalorder %s105, %s121
      %p123 = scmp.eq.s32.totalorder %s20, 0
      %p124 = por %p122, %p123
      %s125 = ssub.s32 %s21, %s33
      %s126 = ssub.s32 %s22, %s29
      %s127 = sor.u32 %s125, %s126
      %p128 = scmp.eq.s32.totalorder %s127, 0
      %s130 = sadd.s32 %s129, 1
      %s131 = scalar_select %p128, %s129, %s130
      %p134 = pneg %p128
      %p135 = scmp.eq.s32.totalorder %s14, 1
      %p136 = por %p134, %p135
      %p137 = scmp.ne.s32.totalorder %s129, %s132
      %p138 = scmp.eq.s32.totalorder %s14, 0
      %p139 = por %p137, %p138
      %p140 = scmp.ne.s32.totalorder %s129, %s132
      %p141 = scmp.eq.s32.totalorder %s19, 1
      %p142 = por %p140, %p141
      %p143 = scmp.ne.s32.totalorder %s132, %s133
      %p144 = scmp.eq.s32.totalorder %s19, 0
      %p145 = por %p143, %p144
      %p146 = scmp.ne.s32.totalorder %s132, %s133
      %p147 = scmp.eq.s32.totalorder %s20, 1
      %p148 = por %p146, %p147
      %p150 = scmp.ne.s32.totalorder %s133, %s149
      %p151 = scmp.eq.s32.totalorder %s20, 0
      %p152 = por %p150, %p151
      %p153 = scmp.le.s32.totalorder 1, %s14
      %p154 = scmp.lt.s32.totalorder %s14, 3
      %p155 = pnand %p153, %p154
      %p156 = pneg %p155
      // Predicated region
      $region9: #{adaptive_mix_pool.1} parent=5 // pred_check
        _
      $region10: #{adaptive_mix_pool.1} parent=5 // pred_check_branch
        %158 = sbr.rel (%p155) target = $region12
      $region11: #{adaptive_mix_pool.1} parent=5 // pred_region
        %s159 = ssub.s32 %s14, 1
        // Predicated region
        $region13: #{adaptive_mix_pool.1} parent=11 // pred_check
          %p160 = pneg %p47
        $region14: #{adaptive_mix_pool.1} parent=11 // pred_check_branch
          %162 = sbr.rel (%p160) target = $region16
        $region15: #{adaptive_mix_pool.1} parent=11 // pred_region
          _
        $region16: #{adaptive_mix_pool.1} parent=11 // pred_fallthru
          _
        // Predicated region
        $region17: #{adaptive_mix_pool.1} parent=11 // pred_check
          %p163 = pneg %p68
        $region18: #{adaptive_mix_pool.1} parent=11 // pred_check_branch
          %165 = sbr.rel (%p163) target = $region20
        $region19: #{adaptive_mix_pool.1} parent=11 // pred_region
          _
        $region20: #{adaptive_mix_pool.1} parent=11 // pred_fallthru
          _
        // Predicated region
        $region21: #{adaptive_mix_pool.1} parent=11 // pred_check
          %p166 = pneg %p89
        $region22: #{adaptive_mix_pool.1} parent=11 // pred_check_branch
          %168 = sbr.rel (%p166) target = $region24
        $region23: #{adaptive_mix_pool.1} parent=11 // pred_region
          _
        $region24: #{adaptive_mix_pool.1} parent=11 // pred_fallthru
          _
      $region12: #{adaptive_mix_pool.1} parent=5 // pred_fallthru
        _
      %p169 = scmp.lt.s32.totalorder %s14, 2
      // Predicated region
      $region25: #{adaptive_mix_pool.1} parent=5 // pred_check
        %p170 = pneg %p169
      $region26: #{adaptive_mix_pool.1} parent=5 // pred_check_branch
        %172 = sbr.rel (%p170) target = $region28
      $region27: #{adaptive_mix_pool.1} parent=5 // pred_region
        // Predicated region
        $region29: #{adaptive_mix_pool.1} parent=27 // pred_check
          %p173 = pneg %p111
        $region30: #{adaptive_mix_pool.1} parent=27 // pred_check_branch
          %175 = sbr.rel (%p173) target = $region32
        $region31: #{adaptive_mix_pool.1} parent=27 // pred_region
          %p176 = scmp.lt.s32.totalorder %s21, 1
          %s177 = scalar_select %p176, %s21, 1
          %p178 = scmp.lt.s32.totalorder %s22, 0
          %s179 = scalar_select %p178, %s22, 0
          %s180 = smul.addr %s177, 4
          %s181 = sadd.s32 %s179, %s180
          %s182 = smul.addr %s181, 8
          %s183 = scalar_lea.vmem %s3, %s182
        $region32: #{adaptive_mix_pool.1} parent=27 // pred_fallthru
          _
      $region28: #{adaptive_mix_pool.1} parent=5 // pred_fallthru
        _
      %p184 = scmp.le.s32.totalorder 1, %s14
      %p185 = scmp.lt.s32.totalorder %s14, 3
      %p186 = pnand %p184, %p185
      %p187 = pneg %p186
      // Predicated region
      $region33: #{adaptive_mix_pool.1} parent=5 // pred_check
        _
      $region34: #{adaptive_mix_pool.1} parent=5 // pred_check_branch
        %189 = sbr.rel (%p186) target = $region36
      $region35: #{adaptive_mix_pool.1} parent=5 // pred_region
        %s190 = ssub.s32 %s14, 1
        %p191 = pneg %p47
        %p192 = pneg %p44
        %p193 = pneg %p68
        %p194 = pneg %p65
        %p195 = pneg %p89
        %p196 = pneg %p86
        %p197 = scmp.lt.s32.totalorder %s23, 1
        %s198 = scalar_select %p197, %s23, 1
        %p199 = scmp.lt.s32.totalorder %s24, 0
        %s200 = scalar_select %p199, %s24, 0
        %s201 = smul.addr %s198, 4
        %s202 = sadd.s32 %s200, %s201
        %s203 = smul.addr %s202, 8
        %s204 = scalar_lea.vmem %s3, %s203
        %p205 = pneg %p117
        %p206 = pneg %p114
        %p207 = pneg %p145
        %p208 = pneg %p142
        %s209 = sand.u32 %s132, 1
        %s210 = scalar_lea.sflag [#allocation4], %s209
        %s211 = sand.u32 %s132, 1
        %s212 = smul.addr %s211, 32
        %s213 = scalar_lea.vmem [#allocation3], %s212
        %p214 = scmp.lt.s32.totalorder %s23, 1
        %s215 = scalar_select %p214, %s23, 1
        %p216 = scmp.lt.s32.totalorder %s24, 0
        %s217 = scalar_select %p216, %s24, 0
        %s218 = smul.addr %s215, 4
        %s219 = sadd.s32 %s217, %s218
        %s220 = smul.addr %s219, 8
        %s221 = scalar_lea.vmem %s3, %s220
        %v222 = vld [vmem:[%s221] sm:$0xff]
        %v223 = vld [vmem:[%s221 + $0x8] sm:$0xff]
        %v224 = vld [vmem:[%s221 + $0x10] sm:$0xff]
        %v225 = vld [vmem:[%s221 + $0x18] sm:$0xff]
        %230 = vrot.lane.b32.xlu0 %v222, 112
        %v231 = vpop.permute.xlu0 %230
        %232 = vrot.lane.b32.xlu0 %v223, 112
        %v233 = vpop.permute.xlu0 %232
        %234 = vrot.lane.b32.xlu0 %v224, 112
        %v235 = vpop.permute.xlu0 %234
        %236 = vrot.lane.b32.xlu0 %v225, 112
        %v237 = vpop.permute.xlu0 %236
        %v242 = vmax.f32 %v222, %v231
        %v243 = vmax.f32 %v223, %v233
        %v244 = vmax.f32 %v224, %v235
        %v245 = vmax.f32 %v225, %v237
        %v246 = vadd.f32 %v222, %v231
        %v247 = vadd.f32 %v223, %v233
        %v248 = vadd.f32 %v224, %v235
        %v249 = vadd.f32 %v225, %v237
        %v250 = vld [vmem:[%s2] sm:$0xff]
        %v251 = vld [vmem:[%s2 + $0x8] sm:$0xff]
        %vm252 = vcmask 130048
        %v254 = vsel %vm252, %v242, 0
        %v257 = vsel %vm252, %v243, 0
        %v260 = vsel %vm252, %v244, 0
        %v263 = vsel %vm252, %v245, 0
        %265 = vmatprep.subr.mxu0 0.0
        %266 = vmatpush1.msra.mxu0 0.0
        %267 = vmatprep.subr.mxu0 0.0
        %268 = vmatpush1.msra.mxu0 0.0
        %269 = vmatprep.subr.mxu0 0.0
        %270 = vmatpush1.msra.mxu0 0.0
        %271 = vmatprep.subr.mxu0 0.0
        %272 = vmatpush1.msra.mxu0 0.0
        %273 = vmatprep.subr.mxu0 0.0
        %274 = vmatpush1.msra.mxu0 0.0
        %275 = vmatprep.subr.mxu0 0.0
        %276 = vmatpush1.msra.mxu0 0.0
        %277 = vmatprep.subr.mxu0 0.0
        %278 = vmatpush1.msra.mxu0 0.0
        %279 = vmatprep.subr.mxu0 0.0
        %280 = vmatpush1.msra.mxu0 0.0
        %281 = vmatprep.subr.mxu0 0.0
        %282 = vmatpush1.msra.mxu0 0.0
        %283 = vmatprep.subr.mxu0 0.0
        %284 = vmatpush1.msra.mxu0 0.0
        %285 = vmatprep.subr.mxu0 0.0
        %286 = vmatpush1.msra.mxu0 0.0
        %287 = vmatprep.subr.mxu0 0.0
        %288 = vmatpush1.msra.mxu0 0.0
        %289 = vmatprep.subr.mxu0 0.0
        %290 = vmatpush1.msra.mxu0 0.0
        %291 = vmatprep.subr.mxu0 0.0
        %292 = vmatpush1.msra.mxu0 0.0
        %293 = vmatprep.subr.mxu0 0.0
        %v294 = vand.u32 %v251, 4294901760
        %295 = vmatpush1.msra.mxu0 %v294
        %296 = vmatprep.subr.mxu0 0.0
        %v297 = vand.u32 %v250, 4294901760
        %298 = vmatpush1.msra.mxu0 %v297
        %299 = vmatprep.subr.mxu0 0.0
        %300 = vmatpush2.msra.mxu0 0.0
        %301 = vmatprep.subr.mxu0 0.0
        %302 = vmatpush2.msra.mxu0 0.0
        %303 = vmatprep.subr.mxu0 0.0
        %304 = vmatpush2.msra.mxu0 0.0
        %305 = vmatprep.subr.mxu0 0.0
        %306 = vmatpush2.msra.mxu0 0.0
        %307 = vmatprep.subr.mxu0 0.0
        %308 = vmatpush2.msra.mxu0 0.0
        %309 = vmatprep.subr.mxu0 0.0
        %310 = vmatpush2.msra.mxu0 0.0
        %311 = vmatprep.subr.mxu0 0.0
        %312 = vmatpush2.msra.mxu0 0.0
        %313 = vmatprep.subr.mxu0 0.0
        %314 = vmatpush2.msra.mxu0 0.0
        %315 = vmatprep.subr.mxu0 0.0
        %316 = vmatpush2.msra.mxu0 0.0
        %317 = vmatprep.subr.mxu0 0.0
        %318 = vmatpush2.msra.mxu0 0.0
        %319 = vmatprep.subr.mxu0 0.0
        %320 = vmatpush2.msra.mxu0 0.0
        %321 = vmatprep.subr.mxu0 0.0
        %322 = vmatpush2.msra.mxu0 0.0
        %323 = vmatprep.subr.mxu0 0.0
        %324 = vmatpush2.msra.mxu0 0.0
        %325 = vmatprep.subr.mxu0 0.0
        %326 = vmatpush2.msra.mxu0 0.0
        %327 = vmatprep.subr.mxu0 0.0
        %328 = vmatpush2.msra.mxu0 0.0
        %329 = vmatprep.subr.mxu0 0.0
        %330 = vmatpush2.msra.mxu0 0.0
        %331 = vmatprep.mubr.f32.mxu0 0.0
        %v332 = vand.u32 %v254, 4294901760
        %v333 = vsub.f32 %v254, %v332
        %v334 = vand.u32 %v333, 4294901760
        %v335 = vsub.f32 %v333, %v334
        %v336 = vand.u32 %v335, 4294901760
        %337 = vmatmul.mubr.f32.gmra.mxu0 %v336
        %v338 = vpop.f32.mrf.mxu0
        %v339 = vadd.f32 0.0, %v338
        %v340 = vpop.f32.mrf.mxu0
        %341 = vmatprep.mubr.f32.mxu0 0.0
        %v342 = vand.u32 %v257, 4294901760
        %v343 = vsub.f32 %v257, %v342
        %v344 = vand.u32 %v343, 4294901760
        %v345 = vsub.f32 %v343, %v344
        %v346 = vand.u32 %v345, 4294901760
        %347 = vmatmul.mubr.f32.gmra.mxu0 %v346
        %v348 = vpop.f32.mrf.mxu0
        %v349 = vadd.f32 0.0, %v348
        %v350 = vpop.f32.mrf.mxu0
        %351 = vmatprep.mubr.f32.mxu0 0.0
        %v352 = vand.u32 %v260, 4294901760
        %v353 = vsub.f32 %v260, %v352
        %v354 = vand.u32 %v353, 4294901760
        %v355 = vsub.f32 %v353, %v354
        %v356 = vand.u32 %v355, 4294901760
        %357 = vmatmul.mubr.f32.gmra.mxu0 %v356
        %v358 = vpop.f32.mrf.mxu0
        %v359 = vadd.f32 0.0, %v358
        %v360 = vpop.f32.mrf.mxu0
        %361 = vmatprep.mubr.f32.mxu0 0.0
        %v362 = vand.u32 %v263, 4294901760
        %v363 = vsub.f32 %v263, %v362
        %v364 = vand.u32 %v363, 4294901760
        %v365 = vsub.f32 %v363, %v364
        %v366 = vand.u32 %v365, 4294901760
        %367 = vmatmul.mubr.f32.gmra.mxu0 %v366
        %v368 = vpop.f32.mrf.mxu0
        %v369 = vadd.f32 0.0, %v368
        %v370 = vpop.f32.mrf.mxu0
        %371 = vdwg.mxu0
        %372 = vmatprep.subr.mxu0 0.0
        %373 = vmatpush1.msra.mxu0 0.0
        %374 = vmatprep.subr.mxu0 0.0
        %375 = vmatpush1.msra.mxu0 0.0
        %376 = vmatprep.subr.mxu0 0.0
        %377 = vmatpush1.msra.mxu0 0.0
        %378 = vmatprep.subr.mxu0 0.0
        %379 = vmatpush1.msra.mxu0 0.0
        %380 = vmatprep.subr.mxu0 0.0
        %381 = vmatpush1.msra.mxu0 0.0
        %382 = vmatprep.subr.mxu0 0.0
        %383 = vmatpush1.msra.mxu0 0.0
        %384 = vmatprep.subr.mxu0 0.0
        %385 = vmatpush1.msra.mxu0 0.0
        %386 = vmatprep.subr.mxu0 0.0
        %387 = vmatpush1.msra.mxu0 0.0
        %388 = vmatprep.subr.mxu0 0.0
        %389 = vmatpush1.msra.mxu0 0.0
        %390 = vmatprep.subr.mxu0 0.0
        %391 = vmatpush1.msra.mxu0 0.0
        %392 = vmatprep.subr.mxu0 0.0
        %393 = vmatpush1.msra.mxu0 0.0
        %394 = vmatprep.subr.mxu0 0.0
        %395 = vmatpush1.msra.mxu0 0.0
        %396 = vmatprep.subr.mxu0 0.0
        %397 = vmatpush1.msra.mxu0 0.0
        %398 = vmatprep.subr.mxu0 0.0
        %399 = vmatpush1.msra.mxu0 0.0
        %400 = vmatprep.subr.mxu0 0.0
        %v401 = vand.u32 %v251, 4294901760
        %v402 = vsub.f32 %v251, %v401
        %v403 = vand.u32 %v402, 4294901760
        %v404 = vsub.f32 %v402, %v403
        %v405 = vand.u32 %v404, 4294901760
        %406 = vmatpush1.msra.mxu0 %v405
        %407 = vmatprep.subr.mxu0 0.0
        %v408 = vand.u32 %v250, 4294901760
        %v409 = vsub.f32 %v250, %v408
        %v410 = vand.u32 %v409, 4294901760
        %v411 = vsub.f32 %v409, %v410
        %v412 = vand.u32 %v411, 4294901760
        %413 = vmatpush1.msra.mxu0 %v412
        %414 = vmatprep.subr.mxu0 0.0
        %415 = vmatpush2.msra.mxu0 0.0
        %416 = vmatprep.subr.mxu0 0.0
        %417 = vmatpush2.msra.mxu0 0.0
        %418 = vmatprep.subr.mxu0 0.0
        %419 = vmatpush2.msra.mxu0 0.0
        %420 = vmatprep.subr.mxu0 0.0
        %421 = vmatpush2.msra.mxu0 0.0
        %422 = vmatprep.subr.mxu0 0.0
        %423 = vmatpush2.msra.mxu0 0.0
        %424 = vmatprep.subr.mxu0 0.0
        %425 = vmatpush2.msra.mxu0 0.0
        %426 = vmatprep.subr.mxu0 0.0
        %427 = vmatpush2.msra.mxu0 0.0
        %428 = vmatprep.subr.mxu0 0.0
        %429 = vmatpush2.msra.mxu0 0.0
        %430 = vmatprep.subr.mxu0 0.0
        %431 = vmatpush2.msra.mxu0 0.0
        %432 = vmatprep.subr.mxu0 0.0
        %433 = vmatpush2.msra.mxu0 0.0
        %434 = vmatprep.subr.mxu0 0.0
        %435 = vmatpush2.msra.mxu0 0.0
        %436 = vmatprep.subr.mxu0 0.0
        %437 = vmatpush2.msra.mxu0 0.0
        %438 = vmatprep.subr.mxu0 0.0
        %439 = vmatpush2.msra.mxu0 0.0
        %440 = vmatprep.subr.mxu0 0.0
        %441 = vmatpush2.msra.mxu0 0.0
        %442 = vmatprep.subr.mxu0 0.0
        %443 = vmatpush2.msra.mxu0 0.0
        %444 = vmatprep.subr.mxu0 0.0
        %445 = vmatpush2.msra.mxu0 0.0
        %446 = vmatprep.mubr.f32.mxu0 0.0
        %v447 = vand.u32 %v254, 4294901760
        %448 = vmatmul.mubr.f32.gmra.mxu0 %v447
        %v449 = vpop.f32.mrf.mxu0
        %v450 = vadd.f32 %v339, %v449
        %v451 = vpop.f32.mrf.mxu0
        %452 = vmatprep.mubr.f32.mxu0 0.0
        %v453 = vand.u32 %v257, 4294901760
        %454 = vmatmul.mubr.f32.gmra.mxu0 %v453
        %v455 = vpop.f32.mrf.mxu0
        %v456 = vadd.f32 %v349, %v455
        %v457 = vpop.f32.mrf.mxu0
        %458 = vmatprep.mubr.f32.mxu0 0.0
        %v459 = vand.u32 %v260, 4294901760
        %460 = vmatmul.mubr.f32.gmra.mxu0 %v459
        %v461 = vpop.f32.mrf.mxu0
        %v462 = vadd.f32 %v359, %v461
        %v463 = vpop.f32.mrf.mxu0
        %464 = vmatprep.mubr.f32.mxu0 0.0
        %v465 = vand.u32 %v263, 4294901760
        %466 = vmatmul.mubr.f32.gmra.mxu0 %v465
        %v467 = vpop.f32.mrf.mxu0
        %v468 = vadd.f32 %v369, %v467
        %v469 = vpop.f32.mrf.mxu0
        %470 = vdwg.mxu0
        %471 = vmatprep.subr.mxu0 0.0
        %472 = vmatpush1.msra.mxu0 0.0
        %473 = vmatprep.subr.mxu0 0.0
        %474 = vmatpush1.msra.mxu0 0.0
        %475 = vmatprep.subr.mxu0 0.0
        %476 = vmatpush1.msra.mxu0 0.0
        %477 = vmatprep.subr.mxu0 0.0
        %478 = vmatpush1.msra.mxu0 0.0
        %479 = vmatprep.subr.mxu0 0.0
        %480 = vmatpush1.msra.mxu0 0.0
        %481 = vmatprep.subr.mxu0 0.0
        %482 = vmatpush1.msra.mxu0 0.0
        %483 = vmatprep.subr.mxu0 0.0
        %484 = vmatpush1.msra.mxu0 0.0
        %485 = vmatprep.subr.mxu0 0.0
        %486 = vmatpush1.msra.mxu0 0.0
        %487 = vmatprep.subr.mxu0 0.0
        %488 = vmatpush1.msra.mxu0 0.0
        %489 = vmatprep.subr.mxu0 0.0
        %490 = vmatpush1.msra.mxu0 0.0
        %491 = vmatprep.subr.mxu0 0.0
        %492 = vmatpush1.msra.mxu0 0.0
        %493 = vmatprep.subr.mxu0 0.0
        %494 = vmatpush1.msra.mxu0 0.0
        %495 = vmatprep.subr.mxu0 0.0
        %496 = vmatpush1.msra.mxu0 0.0
        %497 = vmatprep.subr.mxu0 0.0
        %498 = vmatpush1.msra.mxu0 0.0
        %499 = vmatprep.subr.mxu0 0.0
        %v500 = vand.u32 %v251, 4294901760
        %v501 = vsub.f32 %v251, %v500
        %502 = vmatpush1.msra.mxu0 %v501
        %503 = vmatprep.subr.mxu0 0.0
        %v504 = vand.u32 %v250, 4294901760
        %v505 = vsub.f32 %v250, %v504
        %506 = vmatpush1.msra.mxu0 %v505
        %507 = vmatprep.subr.mxu0 0.0
        %508 = vmatpush2.msra.mxu0 0.0
        %509 = vmatprep.subr.mxu0 0.0
        %510 = vmatpush2.msra.mxu0 0.0
        %511 = vmatprep.subr.mxu0 0.0
        %512 = vmatpush2.msra.mxu0 0.0
        %513 = vmatprep.subr.mxu0 0.0
        %514 = vmatpush2.msra.mxu0 0.0
        %515 = vmatprep.subr.mxu0 0.0
        %516 = vmatpush2.msra.mxu0 0.0
        %517 = vmatprep.subr.mxu0 0.0
        %518 = vmatpush2.msra.mxu0 0.0
        %519 = vmatprep.subr.mxu0 0.0
        %520 = vmatpush2.msra.mxu0 0.0
        %521 = vmatprep.subr.mxu0 0.0
        %522 = vmatpush2.msra.mxu0 0.0
        %523 = vmatprep.subr.mxu0 0.0
        %524 = vmatpush2.msra.mxu0 0.0
        %525 = vmatprep.subr.mxu0 0.0
        %526 = vmatpush2.msra.mxu0 0.0
        %527 = vmatprep.subr.mxu0 0.0
        %528 = vmatpush2.msra.mxu0 0.0
        %529 = vmatprep.subr.mxu0 0.0
        %530 = vmatpush2.msra.mxu0 0.0
        %531 = vmatprep.subr.mxu0 0.0
        %532 = vmatpush2.msra.mxu0 0.0
        %533 = vmatprep.subr.mxu0 0.0
        %534 = vmatpush2.msra.mxu0 0.0
        %535 = vmatprep.subr.mxu0 0.0
        %536 = vmatpush2.msra.mxu0 0.0
        %537 = vmatprep.subr.mxu0 0.0
        %538 = vmatpush2.msra.mxu0 0.0
        %539 = vmatprep.mubr.f32.mxu0 0.0
        %v540 = vand.u32 %v254, 4294901760
        %v541 = vsub.f32 %v254, %v540
        %542 = vmatmul.mubr.f32.gmra.mxu0 %v541
        %v543 = vpop.f32.mrf.mxu0
        %v544 = vadd.f32 %v450, %v543
        %v545 = vpop.f32.mrf.mxu0
        %546 = vmatprep.mubr.f32.mxu0 0.0
        %v547 = vand.u32 %v257, 4294901760
        %v548 = vsub.f32 %v257, %v547
        %549 = vmatmul.mubr.f32.gmra.mxu0 %v548
        %v550 = vpop.f32.mrf.mxu0
        %v551 = vadd.f32 %v456, %v550
        %v552 = vpop.f32.mrf.mxu0
        %553 = vmatprep.mubr.f32.mxu0 0.0
        %v554 = vand.u32 %v260, 4294901760
        %v555 = vsub.f32 %v260, %v554
        %556 = vmatmul.mubr.f32.gmra.mxu0 %v555
        %v557 = vpop.f32.mrf.mxu0
        %v558 = vadd.f32 %v462, %v557
        %v559 = vpop.f32.mrf.mxu0
        %560 = vmatprep.mubr.f32.mxu0 0.0
        %v561 = vand.u32 %v263, 4294901760
        %v562 = vsub.f32 %v263, %v561
        %563 = vmatmul.mubr.f32.gmra.mxu0 %v562
        %v564 = vpop.f32.mrf.mxu0
        %v565 = vadd.f32 %v468, %v564
        %v566 = vpop.f32.mrf.mxu0
        %567 = vdwg.mxu0
        %568 = vmatprep.subr.mxu0 0.0
        %569 = vmatpush1.msra.mxu0 0.0
        %570 = vmatprep.subr.mxu0 0.0
        %571 = vmatpush1.msra.mxu0 0.0
        %572 = vmatprep.subr.mxu0 0.0
        %573 = vmatpush1.msra.mxu0 0.0
        %574 = vmatprep.subr.mxu0 0.0
        %575 = vmatpush1.msra.mxu0 0.0
        %576 = vmatprep.subr.mxu0 0.0
        %577 = vmatpush1.msra.mxu0 0.0
        %578 = vmatprep.subr.mxu0 0.0
        %579 = vmatpush1.msra.mxu0 0.0
        %580 = vmatprep.subr.mxu0 0.0
        %581 = vmatpush1.msra.mxu0 0.0
        %582 = vmatprep.subr.mxu0 0.0
        %583 = vmatpush1.msra.mxu0 0.0
        %584 = vmatprep.subr.mxu0 0.0
        %585 = vmatpush1.msra.mxu0 0.0
        %586 = vmatprep.subr.mxu0 0.0
        %587 = vmatpush1.msra.mxu0 0.0
        %588 = vmatprep.subr.mxu0 0.0
        %589 = vmatpush1.msra.mxu0 0.0
        %590 = vmatprep.subr.mxu0 0.0
        %591 = vmatpush1.msra.mxu0 0.0
        %592 = vmatprep.subr.mxu0 0.0
        %593 = vmatpush1.msra.mxu0 0.0
        %594 = vmatprep.subr.mxu0 0.0
        %595 = vmatpush1.msra.mxu0 0.0
        %596 = vmatprep.subr.mxu0 0.0
        %v597 = vand.u32 %v251, 4294901760
        %598 = vmatpush1.msra.mxu0 %v597
        %599 = vmatprep.subr.mxu0 0.0
        %v600 = vand.u32 %v250, 4294901760
        %601 = vmatpush1.msra.mxu0 %v600
        %602 = vmatprep.subr.mxu0 0.0
        %603 = vmatpush2.msra.mxu0 0.0
        %604 = vmatprep.subr.mxu0 0.0
        %605 = vmatpush2.msra.mxu0 0.0
        %606 = vmatprep.subr.mxu0 0.0
        %607 = vmatpush2.msra.mxu0 0.0
        %608 = vmatprep.subr.mxu0 0.0
        %609 = vmatpush2.msra.mxu0 0.0
        %610 = vmatprep.subr.mxu0 0.0
        %611 = vmatpush2.msra.mxu0 0.0
        %612 = vmatprep.subr.mxu0 0.0
        %613 = vmatpush2.msra.mxu0 0.0
        %614 = vmatprep.subr.mxu0 0.0
        %615 = vmatpush2.msra.mxu0 0.0
        %616 = vmatprep.subr.mxu0 0.0
        %617 = vmatpush2.msra.mxu0 0.0
        %618 = vmatprep.subr.mxu0 0.0
        %619 = vmatpush2.msra.mxu0 0.0
        %620 = vmatprep.subr.mxu0 0.0
        %621 = vmatpush2.msra.mxu0 0.0
        %622 = vmatprep.subr.mxu0 0.0
        %623 = vmatpush2.msra.mxu0 0.0
        %624 = vmatprep.subr.mxu0 0.0
        %625 = vmatpush2.msra.mxu0 0.0
        %626 = vmatprep.subr.mxu0 0.0
        %627 = vmatpush2.msra.mxu0 0.0
        %628 = vmatprep.subr.mxu0 0.0
        %629 = vmatpush2.msra.mxu0 0.0
        %630 = vmatprep.subr.mxu0 0.0
        %631 = vmatpush2.msra.mxu0 0.0
        %632 = vmatprep.subr.mxu0 0.0
        %633 = vmatpush2.msra.mxu0 0.0
        %634 = vmatprep.mubr.f32.mxu0 0.0
        %v635 = vand.u32 %v254, 4294901760
        %v636 = vsub.f32 %v254, %v635
        %v637 = vand.u32 %v636, 4294901760
        %638 = vmatmul.mubr.f32.gmra.mxu0 %v637
        %v639 = vpop.f32.mrf.mxu0
        %v640 = vadd.f32 %v544, %v639
        %v641 = vpop.f32.mrf.mxu0
        %642 = vmatprep.mubr.f32.mxu0 0.0
        %v643 = vand.u32 %v257, 4294901760
        %v644 = vsub.f32 %v257, %v643
        %v645 = vand.u32 %v644, 4294901760
        %646 = vmatmul.mubr.f32.gmra.mxu0 %v645
        %v647 = vpop.f32.mrf.mxu0
        %v648 = vadd.f32 %v551, %v647
        %v649 = vpop.f32.mrf.mxu0
        %650 = vmatprep.mubr.f32.mxu0 0.0
        %v651 = vand.u32 %v260, 4294901760
        %v652 = vsub.f32 %v260, %v651
        %v653 = vand.u32 %v652, 4294901760
        %654 = vmatmul.mubr.f32.gmra.mxu0 %v653
        %v655 = vpop.f32.mrf.mxu0
        %v656 = vadd.f32 %v558, %v655
        %v657 = vpop.f32.mrf.mxu0
        %658 = vmatprep.mubr.f32.mxu0 0.0
        %v659 = vand.u32 %v263, 4294901760
        %v660 = vsub.f32 %v263, %v659
        %v661 = vand.u32 %v660, 4294901760
        %662 = vmatmul.mubr.f32.gmra.mxu0 %v661
        %v663 = vpop.f32.mrf.mxu0
        %v664 = vadd.f32 %v565, %v663
        %v665 = vpop.f32.mrf.mxu0
        %666 = vdwg.mxu0
        %667 = vmatprep.subr.mxu0 0.0
        %668 = vmatpush1.msra.mxu0 0.0
        %669 = vmatprep.subr.mxu0 0.0
        %670 = vmatpush1.msra.mxu0 0.0
        %671 = vmatprep.subr.mxu0 0.0
        %672 = vmatpush1.msra.mxu0 0.0
        %673 = vmatprep.subr.mxu0 0.0
        %674 = vmatpush1.msra.mxu0 0.0
        %675 = vmatprep.subr.mxu0 0.0
        %676 = vmatpush1.msra.mxu0 0.0
        %677 = vmatprep.subr.mxu0 0.0
        %678 = vmatpush1.msra.mxu0 0.0
        %679 = vmatprep.subr.mxu0 0.0
        %680 = vmatpush1.msra.mxu0 0.0
        %681 = vmatprep.subr.mxu0 0.0
        %682 = vmatpush1.msra.mxu0 0.0
        %683 = vmatprep.subr.mxu0 0.0
        %684 = vmatpush1.msra.mxu0 0.0
        %685 = vmatprep.subr.mxu0 0.0
        %686 = vmatpush1.msra.mxu0 0.0
        %687 = vmatprep.subr.mxu0 0.0
        %688 = vmatpush1.msra.mxu0 0.0
        %689 = vmatprep.subr.mxu0 0.0
        %690 = vmatpush1.msra.mxu0 0.0
        %691 = vmatprep.subr.mxu0 0.0
        %692 = vmatpush1.msra.mxu0 0.0
        %693 = vmatprep.subr.mxu0 0.0
        %694 = vmatpush1.msra.mxu0 0.0
        %695 = vmatprep.subr.mxu0 0.0
        %v696 = vand.u32 %v251, 4294901760
        %v697 = vsub.f32 %v251, %v696
        %v698 = vand.u32 %v697, 4294901760
        %699 = vmatpush1.msra.mxu0 %v698
        %700 = vmatprep.subr.mxu0 0.0
        %v701 = vand.u32 %v250, 4294901760
        %v702 = vsub.f32 %v250, %v701
        %v703 = vand.u32 %v702, 4294901760
        %704 = vmatpush1.msra.mxu0 %v703
        %705 = vmatprep.subr.mxu0 0.0
        %706 = vmatpush2.msra.mxu0 0.0
        %707 = vmatprep.subr.mxu0 0.0
        %708 = vmatpush2.msra.mxu0 0.0
        %709 = vmatprep.subr.mxu0 0.0
        %710 = vmatpush2.msra.mxu0 0.0
        %711 = vmatprep.subr.mxu0 0.0
        %712 = vmatpush2.msra.mxu0 0.0
        %713 = vmatprep.subr.mxu0 0.0
        %714 = vmatpush2.msra.mxu0 0.0
        %715 = vmatprep.subr.mxu0 0.0
        %716 = vmatpush2.msra.mxu0 0.0
        %717 = vmatprep.subr.mxu0 0.0
        %718 = vmatpush2.msra.mxu0 0.0
        %719 = vmatprep.subr.mxu0 0.0
        %720 = vmatpush2.msra.mxu0 0.0
        %721 = vmatprep.subr.mxu0 0.0
        %722 = vmatpush2.msra.mxu0 0.0
        %723 = vmatprep.subr.mxu0 0.0
        %724 = vmatpush2.msra.mxu0 0.0
        %725 = vmatprep.subr.mxu0 0.0
        %726 = vmatpush2.msra.mxu0 0.0
        %727 = vmatprep.subr.mxu0 0.0
        %728 = vmatpush2.msra.mxu0 0.0
        %729 = vmatprep.subr.mxu0 0.0
        %730 = vmatpush2.msra.mxu0 0.0
        %731 = vmatprep.subr.mxu0 0.0
        %732 = vmatpush2.msra.mxu0 0.0
        %733 = vmatprep.subr.mxu0 0.0
        %734 = vmatpush2.msra.mxu0 0.0
        %735 = vmatprep.subr.mxu0 0.0
        %736 = vmatpush2.msra.mxu0 0.0
        %737 = vmatprep.mubr.f32.mxu0 0.0
        %v738 = vand.u32 %v254, 4294901760
        %739 = vmatmul.mubr.f32.gmra.mxu0 %v738
        %v740 = vpop.f32.mrf.mxu0
        %v741 = vadd.f32 %v640, %v740
        %v742 = vpop.f32.mrf.mxu0
        %743 = vmatprep.mubr.f32.mxu0 0.0
        %v744 = vand.u32 %v257, 4294901760
        %745 = vmatmul.mubr.f32.gmra.mxu0 %v744
        %v746 = vpop.f32.mrf.mxu0
        %v747 = vadd.f32 %v648, %v746
        %v748 = vpop.f32.mrf.mxu0
        %749 = vmatprep.mubr.f32.mxu0 0.0
        %v750 = vand.u32 %v260, 4294901760
        %751 = vmatmul.mubr.f32.gmra.mxu0 %v750
        %v752 = vpop.f32.mrf.mxu0
        %v753 = vadd.f32 %v656, %v752
        %v754 = vpop.f32.mrf.mxu0
        %755 = vmatprep.mubr.f32.mxu0 0.0
        %v756 = vand.u32 %v263, 4294901760
        %757 = vmatmul.mubr.f32.gmra.mxu0 %v756
        %v758 = vpop.f32.mrf.mxu0
        %v759 = vadd.f32 %v664, %v758
        %v760 = vpop.f32.mrf.mxu0
        %761 = vdwg.mxu0
        %762 = vmatprep.subr.mxu0 0.0
        %763 = vmatpush1.msra.mxu0 0.0
        %764 = vmatprep.subr.mxu0 0.0
        %765 = vmatpush1.msra.mxu0 0.0
        %766 = vmatprep.subr.mxu0 0.0
        %767 = vmatpush1.msra.mxu0 0.0
        %768 = vmatprep.subr.mxu0 0.0
        %769 = vmatpush1.msra.mxu0 0.0
        %770 = vmatprep.subr.mxu0 0.0
        %771 = vmatpush1.msra.mxu0 0.0
        %772 = vmatprep.subr.mxu0 0.0
        %773 = vmatpush1.msra.mxu0 0.0
        %774 = vmatprep.subr.mxu0 0.0
        %775 = vmatpush1.msra.mxu0 0.0
        %776 = vmatprep.subr.mxu0 0.0
        %777 = vmatpush1.msra.mxu0 0.0
        %778 = vmatprep.subr.mxu0 0.0
        %779 = vmatpush1.msra.mxu0 0.0
        %780 = vmatprep.subr.mxu0 0.0
        %781 = vmatpush1.msra.mxu0 0.0
        %782 = vmatprep.subr.mxu0 0.0
        %783 = vmatpush1.msra.mxu0 0.0
        %784 = vmatprep.subr.mxu0 0.0
        %785 = vmatpush1.msra.mxu0 0.0
        %786 = vmatprep.subr.mxu0 0.0
        %787 = vmatpush1.msra.mxu0 0.0
        %788 = vmatprep.subr.mxu0 0.0
        %789 = vmatpush1.msra.mxu0 0.0
        %790 = vmatprep.subr.mxu0 0.0
        %v791 = vand.u32 %v251, 4294901760
        %792 = vmatpush1.msra.mxu0 %v791
        %793 = vmatprep.subr.mxu0 0.0
        %v794 = vand.u32 %v250, 4294901760
        %795 = vmatpush1.msra.mxu0 %v794
        %796 = vmatprep.subr.mxu0 0.0
        %797 = vmatpush2.msra.mxu0 0.0
        %798 = vmatprep.subr.mxu0 0.0
        %799 = vmatpush2.msra.mxu0 0.0
        %800 = vmatprep.subr.mxu0 0.0
        %801 = vmatpush2.msra.mxu0 0.0
        %802 = vmatprep.subr.mxu0 0.0
        %803 = vmatpush2.msra.mxu0 0.0
        %804 = vmatprep.subr.mxu0 0.0
        %805 = vmatpush2.msra.mxu0 0.0
        %806 = vmatprep.subr.mxu0 0.0
        %807 = vmatpush2.msra.mxu0 0.0
        %808 = vmatprep.subr.mxu0 0.0
        %809 = vmatpush2.msra.mxu0 0.0
        %810 = vmatprep.subr.mxu0 0.0
        %811 = vmatpush2.msra.mxu0 0.0
        %812 = vmatprep.subr.mxu0 0.0
        %813 = vmatpush2.msra.mxu0 0.0
        %814 = vmatprep.subr.mxu0 0.0
        %815 = vmatpush2.msra.mxu0 0.0
        %816 = vmatprep.subr.mxu0 0.0
        %817 = vmatpush2.msra.mxu0 0.0
        %818 = vmatprep.subr.mxu0 0.0
        %819 = vmatpush2.msra.mxu0 0.0
        %820 = vmatprep.subr.mxu0 0.0
        %821 = vmatpush2.msra.mxu0 0.0
        %822 = vmatprep.subr.mxu0 0.0
        %823 = vmatpush2.msra.mxu0 0.0
        %824 = vmatprep.subr.mxu0 0.0
        %825 = vmatpush2.msra.mxu0 0.0
        %826 = vmatprep.subr.mxu0 0.0
        %827 = vmatpush2.msra.mxu0 0.0
        %828 = vmatprep.mubr.f32.mxu0 0.0
        %v829 = vand.u32 %v254, 4294901760
        %830 = vmatmul.mubr.f32.gmra.mxu0 %v829
        %v831 = vpop.f32.mrf.mxu0
        %v832 = vadd.f32 %v741, %v831
        %v833 = vpop.f32.mrf.mxu0
        %834 = vmatprep.mubr.f32.mxu0 0.0
        %v835 = vand.u32 %v257, 4294901760
        %836 = vmatmul.mubr.f32.gmra.mxu0 %v835
        %v837 = vpop.f32.mrf.mxu0
        %v838 = vadd.f32 %v747, %v837
        %v839 = vpop.f32.mrf.mxu0
        %840 = vmatprep.mubr.f32.mxu0 0.0
        %v841 = vand.u32 %v260, 4294901760
        %842 = vmatmul.mubr.f32.gmra.mxu0 %v841
        %v843 = vpop.f32.mrf.mxu0
        %v844 = vadd.f32 %v753, %v843
        %v845 = vpop.f32.mrf.mxu0
        %846 = vmatprep.mubr.f32.mxu0 0.0
        %v847 = vand.u32 %v263, 4294901760
        %848 = vmatmul.mubr.f32.gmra.mxu0 %v847
        %v849 = vpop.f32.mrf.mxu0
        %v850 = vadd.f32 %v759, %v849
        %v851 = vpop.f32.mrf.mxu0
        %852 = vdwg.mxu0
        %s853 = scalar_lea.vmem %s2, 16
        %v854 = vld [vmem:[%s853] sm:$0xff]
        %v855 = vld [vmem:[%s853 + $0x8] sm:$0xff]
        %856 = vmatprep.subr.mxu0 0.0
        %857 = vmatpush1.msra.mxu0 0.0
        %858 = vmatprep.subr.mxu0 0.0
        %859 = vmatpush1.msra.mxu0 0.0
        %860 = vmatprep.subr.mxu0 0.0
        %861 = vmatpush1.msra.mxu0 0.0
        %862 = vmatprep.subr.mxu0 0.0
        %863 = vmatpush1.msra.mxu0 0.0
        %864 = vmatprep.subr.mxu0 0.0
        %865 = vmatpush1.msra.mxu0 0.0
        %866 = vmatprep.subr.mxu0 0.0
        %867 = vmatpush1.msra.mxu0 0.0
        %868 = vmatprep.subr.mxu0 0.0
        %869 = vmatpush1.msra.mxu0 0.0
        %870 = vmatprep.subr.mxu0 0.0
        %871 = vmatpush1.msra.mxu0 0.0
        %872 = vmatprep.subr.mxu0 0.0
        %873 = vmatpush1.msra.mxu0 0.0
        %874 = vmatprep.subr.mxu0 0.0
        %875 = vmatpush1.msra.mxu0 0.0
        %876 = vmatprep.subr.mxu0 0.0
        %877 = vmatpush1.msra.mxu0 0.0
        %878 = vmatprep.subr.mxu0 0.0
        %879 = vmatpush1.msra.mxu0 0.0
        %880 = vmatprep.subr.mxu0 0.0
        %881 = vmatpush1.msra.mxu0 0.0
        %882 = vmatprep.subr.mxu0 0.0
        %883 = vmatpush1.msra.mxu0 0.0
        %884 = vmatprep.subr.mxu0 0.0
        %v885 = vand.u32 %v855, 4294901760
        %886 = vmatpush1.msra.mxu0 %v885
        %887 = vmatprep.subr.mxu0 0.0
        %v888 = vand.u32 %v854, 4294901760
        %889 = vmatpush1.msra.mxu0 %v888
        %890 = vmatprep.subr.mxu0 0.0
        %891 = vmatpush2.msra.mxu0 0.0
        %892 = vmatprep.subr.mxu0 0.0
        %893 = vmatpush2.msra.mxu0 0.0
        %894 = vmatprep.subr.mxu0 0.0
        %895 = vmatpush2.msra.mxu0 0.0
        %896 = vmatprep.subr.mxu0 0.0
        %897 = vmatpush2.msra.mxu0 0.0
        %898 = vmatprep.subr.mxu0 0.0
        %899 = vmatpush2.msra.mxu0 0.0
        %900 = vmatprep.subr.mxu0 0.0
        %901 = vmatpush2.msra.mxu0 0.0
        %902 = vmatprep.subr.mxu0 0.0
        %903 = vmatpush2.msra.mxu0 0.0
        %904 = vmatprep.subr.mxu0 0.0
        %905 = vmatpush2.msra.mxu0 0.0
        %906 = vmatprep.subr.mxu0 0.0
        %907 = vmatpush2.msra.mxu0 0.0
        %908 = vmatprep.subr.mxu0 0.0
        %909 = vmatpush2.msra.mxu0 0.0
        %910 = vmatprep.subr.mxu0 0.0
        %911 = vmatpush2.msra.mxu0 0.0
        %912 = vmatprep.subr.mxu0 0.0
        %913 = vmatpush2.msra.mxu0 0.0
        %914 = vmatprep.subr.mxu0 0.0
        %915 = vmatpush2.msra.mxu0 0.0
        %916 = vmatprep.subr.mxu0 0.0
        %917 = vmatpush2.msra.mxu0 0.0
        %918 = vmatprep.subr.mxu0 0.0
        %919 = vmatpush2.msra.mxu0 0.0
        %920 = vmatprep.subr.mxu0 0.0
        %921 = vmatpush2.msra.mxu0 0.0
        %922 = vmatprep.mubr.f32.mxu0 0.0
        %v923 = vand.u32 %v254, 4294901760
        %v924 = vsub.f32 %v254, %v923
        %v925 = vand.u32 %v924, 4294901760
        %v926 = vsub.f32 %v924, %v925
        %v927 = vand.u32 %v926, 4294901760
        %928 = vmatmul.mubr.f32.gmra.mxu0 %v927
        %v929 = vpop.f32.mrf.mxu0
        %v930 = vadd.f32 0.0, %v929
        %v931 = vpop.f32.mrf.mxu0
        %932 = vmatprep.mubr.f32.mxu0 0.0
        %v933 = vand.u32 %v257, 4294901760
        %v934 = vsub.f32 %v257, %v933
        %v935 = vand.u32 %v934, 4294901760
        %v936 = vsub.f32 %v934, %v935
        %v937 = vand.u32 %v936, 4294901760
        %938 = vmatmul.mubr.f32.gmra.mxu0 %v937
        %v939 = vpop.f32.mrf.mxu0
        %v940 = vadd.f32 0.0, %v939
        %v941 = vpop.f32.mrf.mxu0
        %942 = vmatprep.mubr.f32.mxu0 0.0
        %v943 = vand.u32 %v260, 4294901760
        %v944 = vsub.f32 %v260, %v943
        %v945 = vand.u32 %v944, 4294901760
        %v946 = vsub.f32 %v944, %v945
        %v947 = vand.u32 %v946, 4294901760
        %948 = vmatmul.mubr.f32.gmra.mxu0 %v947
        %v949 = vpop.f32.mrf.mxu0
        %v950 = vadd.f32 0.0, %v949
        %v951 = vpop.f32.mrf.mxu0
        %952 = vmatprep.mubr.f32.mxu0 0.0
        %v953 = vand.u32 %v263, 4294901760
        %v954 = vsub.f32 %v263, %v953
        %v955 = vand.u32 %v954, 4294901760
        %v956 = vsub.f32 %v954, %v955
        %v957 = vand.u32 %v956, 4294901760
        %958 = vmatmul.mubr.f32.gmra.mxu0 %v957
        %v959 = vpop.f32.mrf.mxu0
        %v960 = vadd.f32 0.0, %v959
        %v961 = vpop.f32.mrf.mxu0
        %962 = vdwg.mxu0
        %963 = vmatprep.subr.mxu0 0.0
        %964 = vmatpush1.msra.mxu0 0.0
        %965 = vmatprep.subr.mxu0 0.0
        %966 = vmatpush1.msra.mxu0 0.0
        %967 = vmatprep.subr.mxu0 0.0
        %968 = vmatpush1.msra.mxu0 0.0
        %969 = vmatprep.subr.mxu0 0.0
        %970 = vmatpush1.msra.mxu0 0.0
        %971 = vmatprep.subr.mxu0 0.0
        %972 = vmatpush1.msra.mxu0 0.0
        %973 = vmatprep.subr.mxu0 0.0
        %974 = vmatpush1.msra.mxu0 0.0
        %975 = vmatprep.subr.mxu0 0.0
        %976 = vmatpush1.msra.mxu0 0.0
        %977 = vmatprep.subr.mxu0 0.0
        %978 = vmatpush1.msra.mxu0 0.0
        %979 = vmatprep.subr.mxu0 0.0
        %980 = vmatpush1.msra.mxu0 0.0
        %981 = vmatprep.subr.mxu0 0.0
        %982 = vmatpush1.msra.mxu0 0.0
        %983 = vmatprep.subr.mxu0 0.0
        %984 = vmatpush1.msra.mxu0 0.0
        %985 = vmatprep.subr.mxu0 0.0
        %986 = vmatpush1.msra.mxu0 0.0
        %987 = vmatprep.subr.mxu0 0.0
        %988 = vmatpush1.msra.mxu0 0.0
        %989 = vmatprep.subr.mxu0 0.0
        %990 = vmatpush1.msra.mxu0 0.0
        %991 = vmatprep.subr.mxu0 0.0
        %v992 = vand.u32 %v855, 4294901760
        %v993 = vsub.f32 %v855, %v992
        %v994 = vand.u32 %v993, 4294901760
        %v995 = vsub.f32 %v993, %v994
        %v996 = vand.u32 %v995, 4294901760
        %997 = vmatpush1.msra.mxu0 %v996
        %998 = vmatprep.subr.mxu0 0.0
        %v999 = vand.u32 %v854, 4294901760
        %v1000 = vsub.f32 %v854, %v999
        %v1001 = vand.u32 %v1000, 4294901760
        %v1002 = vsub.f32 %v1000, %v1001
        %v1003 = vand.u32 %v1002, 4294901760
        %1004 = vmatpush1.msra.mxu0 %v1003
        %1005 = vmatprep.subr.mxu0 0.0
        %1006 = vmatpush2.msra.mxu0 0.0
        %1007 = vmatprep.subr.mxu0 0.0
        %1008 = vmatpush2.msra.mxu0 0.0
        %1009 = vmatprep.subr.mxu0 0.0
        %1010 = vmatpush2.msra.mxu0 0.0
        %1011 = vmatprep.subr.mxu0 0.0
        %1012 = vmatpush2.msra.mxu0 0.0
        %1013 = vmatprep.subr.mxu0 0.0
        %1014 = vmatpush2.msra.mxu0 0.0
        %1015 = vmatprep.subr.mxu0 0.0
        %1016 = vmatpush2.msra.mxu0 0.0
        %1017 = vmatprep.subr.mxu0 0.0
        %1018 = vmatpush2.msra.mxu0 0.0
        %1019 = vmatprep.subr.mxu0 0.0
        %1020 = vmatpush2.msra.mxu0 0.0
        %1021 = vmatprep.subr.mxu0 0.0
        %1022 = vmatpush2.msra.mxu0 0.0
        %1023 = vmatprep.subr.mxu0 0.0
        %1024 = vmatpush2.msra.mxu0 0.0
        %1025 = vmatprep.subr.mxu0 0.0
        %1026 = vmatpush2.msra.mxu0 0.0
        %1027 = vmatprep.subr.mxu0 0.0
        %1028 = vmatpush2.msra.mxu0 0.0
        %1029 = vmatprep.subr.mxu0 0.0
        %1030 = vmatpush2.msra.mxu0 0.0
        %1031 = vmatprep.subr.mxu0 0.0
        %1032 = vmatpush2.msra.mxu0 0.0
        %1033 = vmatprep.subr.mxu0 0.0
        %1034 = vmatpush2.msra.mxu0 0.0
        %1035 = vmatprep.subr.mxu0 0.0
        %1036 = vmatpush2.msra.mxu0 0.0
        %1037 = vmatprep.mubr.f32.mxu0 0.0
        %v1038 = vand.u32 %v254, 4294901760
        %1039 = vmatmul.mubr.f32.gmra.mxu0 %v1038
        %v1040 = vpop.f32.mrf.mxu0
        %v1041 = vadd.f32 %v930, %v1040
        %v1042 = vpop.f32.mrf.mxu0
        %1043 = vmatprep.mubr.f32.mxu0 0.0
        %v1044 = vand.u32 %v257, 4294901760
        %1045 = vmatmul.mubr.f32.gmra.mxu0 %v1044
        %v1046 = vpop.f32.mrf.mxu0
        %v1047 = vadd.f32 %v940, %v1046
        %v1048 = vpop.f32.mrf.mxu0
        %1049 = vmatprep.mubr.f32.mxu0 0.0
        %v1050 = vand.u32 %v260, 4294901760
        %1051 = vmatmul.mubr.f32.gmra.mxu0 %v1050
        %v1052 = vpop.f32.mrf.mxu0
        %v1053 = vadd.f32 %v950, %v1052
        %v1054 = vpop.f32.mrf.mxu0
        %1055 = vmatprep.mubr.f32.mxu0 0.0
        %v1056 = vand.u32 %v263, 4294901760
        %1057 = vmatmul.mubr.f32.gmra.mxu0 %v1056
        %v1058 = vpop.f32.mrf.mxu0
        %v1059 = vadd.f32 %v960, %v1058
        %v1060 = vpop.f32.mrf.mxu0
        %1061 = vdwg.mxu0
        %1062 = vmatprep.subr.mxu0 0.0
        %1063 = vmatpush1.msra.mxu0 0.0
        %1064 = vmatprep.subr.mxu0 0.0
        %1065 = vmatpush1.msra.mxu0 0.0
        %1066 = vmatprep.subr.mxu0 0.0
        %1067 = vmatpush1.msra.mxu0 0.0
        %1068 = vmatprep.subr.mxu0 0.0
        %1069 = vmatpush1.msra.mxu0 0.0
        %1070 = vmatprep.subr.mxu0 0.0
        %1071 = vmatpush1.msra.mxu0 0.0
        %1072 = vmatprep.subr.mxu0 0.0
        %1073 = vmatpush1.msra.mxu0 0.0
        %1074 = vmatprep.subr.mxu0 0.0
        %1075 = vmatpush1.msra.mxu0 0.0
        %1076 = vmatprep.subr.mxu0 0.0
        %1077 = vmatpush1.msra.mxu0 0.0
        %1078 = vmatprep.subr.mxu0 0.0
        %1079 = vmatpush1.msra.mxu0 0.0
        %1080 = vmatprep.subr.mxu0 0.0
        %1081 = vmatpush1.msra.mxu0 0.0
        %1082 = vmatprep.subr.mxu0 0.0
        %1083 = vmatpush1.msra.mxu0 0.0
        %1084 = vmatprep.subr.mxu0 0.0
        %1085 = vmatpush1.msra.mxu0 0.0
        %1086 = vmatprep.subr.mxu0 0.0
        %1087 = vmatpush1.msra.mxu0 0.0
        %1088 = vmatprep.subr.mxu0 0.0
        %1089 = vmatpush1.msra.mxu0 0.0
        %1090 = vmatprep.subr.mxu0 0.0
        %v1091 = vand.u32 %v855, 4294901760
        %v1092 = vsub.f32 %v855, %v1091
        %1093 = vmatpush1.msra.mxu0 %v1092
        %1094 = vmatprep.subr.mxu0 0.0
        %v1095 = vand.u32 %v854, 4294901760
        %v1096 = vsub.f32 %v854, %v1095
        %1097 = vmatpush1.msra.mxu0 %v1096
        %1098 = vmatprep.subr.mxu0 0.0
        %1099 = vmatpush2.msra.mxu0 0.0
        %1100 = vmatprep.subr.mxu0 0.0
        %1101 = vmatpush2.msra.mxu0 0.0
        %1102 = vmatprep.subr.mxu0 0.0
        %1103 = vmatpush2.msra.mxu0 0.0
        %1104 = vmatprep.subr.mxu0 0.0
        %1105 = vmatpush2.msra.mxu0 0.0
        %1106 = vmatprep.subr.mxu0 0.0
        %1107 = vmatpush2.msra.mxu0 0.0
        %1108 = vmatprep.subr.mxu0 0.0
        %1109 = vmatpush2.msra.mxu0 0.0
        %1110 = vmatprep.subr.mxu0 0.0
        %1111 = vmatpush2.msra.mxu0 0.0
        %1112 = vmatprep.subr.mxu0 0.0
        %1113 = vmatpush2.msra.mxu0 0.0
        %1114 = vmatprep.subr.mxu0 0.0
        %1115 = vmatpush2.msra.mxu0 0.0
        %1116 = vmatprep.subr.mxu0 0.0
        %1117 = vmatpush2.msra.mxu0 0.0
        %1118 = vmatprep.subr.mxu0 0.0
        %1119 = vmatpush2.msra.mxu0 0.0
        %1120 = vmatprep.subr.mxu0 0.0
        %1121 = vmatpush2.msra.mxu0 0.0
        %1122 = vmatprep.subr.mxu0 0.0
        %1123 = vmatpush2.msra.mxu0 0.0
        %1124 = vmatprep.subr.mxu0 0.0
        %1125 = vmatpush2.msra.mxu0 0.0
        %1126 = vmatprep.subr.mxu0 0.0
        %1127 = vmatpush2.msra.mxu0 0.0
        %1128 = vmatprep.subr.mxu0 0.0
        %1129 = vmatpush2.msra.mxu0 0.0
        %1130 = vmatprep.mubr.f32.mxu0 0.0
        %v1131 = vand.u32 %v254, 4294901760
        %v1132 = vsub.f32 %v254, %v1131
        %1133 = vmatmul.mubr.f32.gmra.mxu0 %v1132
        %v1134 = vpop.f32.mrf.mxu0
        %v1135 = vadd.f32 %v1041, %v1134
        %v1136 = vpop.f32.mrf.mxu0
        %1137 = vmatprep.mubr.f32.mxu0 0.0
        %v1138 = vand.u32 %v257, 4294901760
        %v1139 = vsub.f32 %v257, %v1138
        %1140 = vmatmul.mubr.f32.gmra.mxu0 %v1139
        %v1141 = vpop.f32.mrf.mxu0
        %v1142 = vadd.f32 %v1047, %v1141
        %v1143 = vpop.f32.mrf.mxu0
        %1144 = vmatprep.mubr.f32.mxu0 0.0
        %v1145 = vand.u32 %v260, 4294901760
        %v1146 = vsub.f32 %v260, %v1145
        %1147 = vmatmul.mubr.f32.gmra.mxu0 %v1146
        %v1148 = vpop.f32.mrf.mxu0
        %v1149 = vadd.f32 %v1053, %v1148
        %v1150 = vpop.f32.mrf.mxu0
        %1151 = vmatprep.mubr.f32.mxu0 0.0
        %v1152 = vand.u32 %v263, 4294901760
        %v1153 = vsub.f32 %v263, %v1152
        %1154 = vmatmul.mubr.f32.gmra.mxu0 %v1153
        %v1155 = vpop.f32.mrf.mxu0
        %v1156 = vadd.f32 %v1059, %v1155
        %v1157 = vpop.f32.mrf.mxu0
        %1158 = vdwg.mxu0
        %1159 = vmatprep.subr.mxu0 0.0
        %1160 = vmatpush1.msra.mxu0 0.0
        %1161 = vmatprep.subr.mxu0 0.0
        %1162 = vmatpush1.msra.mxu0 0.0
        %1163 = vmatprep.subr.mxu0 0.0
        %1164 = vmatpush1.msra.mxu0 0.0
        %1165 = vmatprep.subr.mxu0 0.0
        %1166 = vmatpush1.msra.mxu0 0.0
        %1167 = vmatprep.subr.mxu0 0.0
        %1168 = vmatpush1.msra.mxu0 0.0
        %1169 = vmatprep.subr.mxu0 0.0
        %1170 = vmatpush1.msra.mxu0 0.0
        %1171 = vmatprep.subr.mxu0 0.0
        %1172 = vmatpush1.msra.mxu0 0.0
        %1173 = vmatprep.subr.mxu0 0.0
        %1174 = vmatpush1.msra.mxu0 0.0
        %1175 = vmatprep.subr.mxu0 0.0
        %1176 = vmatpush1.msra.mxu0 0.0
        %1177 = vmatprep.subr.mxu0 0.0
        %1178 = vmatpush1.msra.mxu0 0.0
        %1179 = vmatprep.subr.mxu0 0.0
        %1180 = vmatpush1.msra.mxu0 0.0
        %1181 = vmatprep.subr.mxu0 0.0
        %1182 = vmatpush1.msra.mxu0 0.0
        %1183 = vmatprep.subr.mxu0 0.0
        %1184 = vmatpush1.msra.mxu0 0.0
        %1185 = vmatprep.subr.mxu0 0.0
        %1186 = vmatpush1.msra.mxu0 0.0
        %1187 = vmatprep.subr.mxu0 0.0
        %v1188 = vand.u32 %v855, 4294901760
        %1189 = vmatpush1.msra.mxu0 %v1188
        %1190 = vmatprep.subr.mxu0 0.0
        %v1191 = vand.u32 %v854, 4294901760
        %1192 = vmatpush1.msra.mxu0 %v1191
        %1193 = vmatprep.subr.mxu0 0.0
        %1194 = vmatpush2.msra.mxu0 0.0
        %1195 = vmatprep.subr.mxu0 0.0
        %1196 = vmatpush2.msra.mxu0 0.0
        %1197 = vmatprep.subr.mxu0 0.0
        %1198 = vmatpush2.msra.mxu0 0.0
        %1199 = vmatprep.subr.mxu0 0.0
        %1200 = vmatpush2.msra.mxu0 0.0
        %1201 = vmatprep.subr.mxu0 0.0
        %1202 = vmatpush2.msra.mxu0 0.0
        %1203 = vmatprep.subr.mxu0 0.0
        %1204 = vmatpush2.msra.mxu0 0.0
        %1205 = vmatprep.subr.mxu0 0.0
        %1206 = vmatpush2.msra.mxu0 0.0
        %1207 = vmatprep.subr.mxu0 0.0
        %1208 = vmatpush2.msra.mxu0 0.0
        %1209 = vmatprep.subr.mxu0 0.0
        %1210 = vmatpush2.msra.mxu0 0.0
        %1211 = vmatprep.subr.mxu0 0.0
        %1212 = vmatpush2.msra.mxu0 0.0
        %1213 = vmatprep.subr.mxu0 0.0
        %1214 = vmatpush2.msra.mxu0 0.0
        %1215 = vmatprep.subr.mxu0 0.0
        %1216 = vmatpush2.msra.mxu0 0.0
        %1217 = vmatprep.subr.mxu0 0.0
        %1218 = vmatpush2.msra.mxu0 0.0
        %1219 = vmatprep.subr.mxu0 0.0
        %1220 = vmatpush2.msra.mxu0 0.0
        %1221 = vmatprep.subr.mxu0 0.0
        %1222 = vmatpush2.msra.mxu0 0.0
        %1223 = vmatprep.subr.mxu0 0.0
        %1224 = vmatpush2.msra.mxu0 0.0
        %1225 = vmatprep.mubr.f32.mxu0 0.0
        %v1226 = vand.u32 %v254, 4294901760
        %v1227 = vsub.f32 %v254, %v1226
        %v1228 = vand.u32 %v1227, 4294901760
        %1229 = vmatmul.mubr.f32.gmra.mxu0 %v1228
        %v1230 = vpop.f32.mrf.mxu0
        %v1231 = vadd.f32 %v1135, %v1230
        %v1232 = vpop.f32.mrf.mxu0
        %1233 = vmatprep.mubr.f32.mxu0 0.0
        %v1234 = vand.u32 %v257, 4294901760
        %v1235 = vsub.f32 %v257, %v1234
        %v1236 = vand.u32 %v1235, 4294901760
        %1237 = vmatmul.mubr.f32.gmra.mxu0 %v1236
        %v1238 = vpop.f32.mrf.mxu0
        %v1239 = vadd.f32 %v1142, %v1238
        %v1240 = vpop.f32.mrf.mxu0
        %1241 = vmatprep.mubr.f32.mxu0 0.0
        %v1242 = vand.u32 %v260, 4294901760
        %v1243 = vsub.f32 %v260, %v1242
        %v1244 = vand.u32 %v1243, 4294901760
        %1245 = vmatmul.mubr.f32.gmra.mxu0 %v1244
        %v1246 = vpop.f32.mrf.mxu0
        %v1247 = vadd.f32 %v1149, %v1246
        %v1248 = vpop.f32.mrf.mxu0
        %1249 = vmatprep.mubr.f32.mxu0 0.0
        %v1250 = vand.u32 %v263, 4294901760
        %v1251 = vsub.f32 %v263, %v1250
        %v1252 = vand.u32 %v1251, 4294901760
        %1253 = vmatmul.mubr.f32.gmra.mxu0 %v1252
        %v1254 = vpop.f32.mrf.mxu0
        %v1255 = vadd.f32 %v1156, %v1254
        %v1256 = vpop.f32.mrf.mxu0
        %1257 = vdwg.mxu0
        %1258 = vmatprep.subr.mxu0 0.0
        %1259 = vmatpush1.msra.mxu0 0.0
        %1260 = vmatprep.subr.mxu0 0.0
        %1261 = vmatpush1.msra.mxu0 0.0
        %1262 = vmatprep.subr.mxu0 0.0
        %1263 = vmatpush1.msra.mxu0 0.0
        %1264 = vmatprep.subr.mxu0 0.0
        %1265 = vmatpush1.msra.mxu0 0.0
        %1266 = vmatprep.subr.mxu0 0.0
        %1267 = vmatpush1.msra.mxu0 0.0
        %1268 = vmatprep.subr.mxu0 0.0
        %1269 = vmatpush1.msra.mxu0 0.0
        %1270 = vmatprep.subr.mxu0 0.0
        %1271 = vmatpush1.msra.mxu0 0.0
        %1272 = vmatprep.subr.mxu0 0.0
        %1273 = vmatpush1.msra.mxu0 0.0
        %1274 = vmatprep.subr.mxu0 0.0
        %1275 = vmatpush1.msra.mxu0 0.0
        %1276 = vmatprep.subr.mxu0 0.0
        %1277 = vmatpush1.msra.mxu0 0.0
        %1278 = vmatprep.subr.mxu0 0.0
        %1279 = vmatpush1.msra.mxu0 0.0
        %1280 = vmatprep.subr.mxu0 0.0
        %1281 = vmatpush1.msra.mxu0 0.0
        %1282 = vmatprep.subr.mxu0 0.0
        %1283 = vmatpush1.msra.mxu0 0.0
        %1284 = vmatprep.subr.mxu0 0.0
        %1285 = vmatpush1.msra.mxu0 0.0
        %1286 = vmatprep.subr.mxu0 0.0
        %v1287 = vand.u32 %v855, 4294901760
        %v1288 = vsub.f32 %v855, %v1287
        %v1289 = vand.u32 %v1288, 4294901760
        %1290 = vmatpush1.msra.mxu0 %v1289
        %1291 = vmatprep.subr.mxu0 0.0
        %v1292 = vand.u32 %v854, 4294901760
        %v1293 = vsub.f32 %v854, %v1292
        %v1294 = vand.u32 %v1293, 4294901760
        %1295 = vmatpush1.msra.mxu0 %v1294
        %1296 = vmatprep.subr.mxu0 0.0
        %1297 = vmatpush2.msra.mxu0 0.0
        %1298 = vmatprep.subr.mxu0 0.0
        %1299 = vmatpush2.msra.mxu0 0.0
        %1300 = vmatprep.subr.mxu0 0.0
        %1301 = vmatpush2.msra.mxu0 0.0
        %1302 = vmatprep.subr.mxu0 0.0
        %1303 = vmatpush2.msra.mxu0 0.0
        %1304 = vmatprep.subr.mxu0 0.0
        %1305 = vmatpush2.msra.mxu0 0.0
        %1306 = vmatprep.subr.mxu0 0.0
        %1307 = vmatpush2.msra.mxu0 0.0
        %1308 = vmatprep.subr.mxu0 0.0
        %1309 = vmatpush2.msra.mxu0 0.0
        %1310 = vmatprep.subr.mxu0 0.0
        %1311 = vmatpush2.msra.mxu0 0.0
        %1312 = vmatprep.subr.mxu0 0.0
        %1313 = vmatpush2.msra.mxu0 0.0
        %1314 = vmatprep.subr.mxu0 0.0
        %1315 = vmatpush2.msra.mxu0 0.0
        %1316 = vmatprep.subr.mxu0 0.0
        %1317 = vmatpush2.msra.mxu0 0.0
        %1318 = vmatprep.subr.mxu0 0.0
        %1319 = vmatpush2.msra.mxu0 0.0
        %1320 = vmatprep.subr.mxu0 0.0
        %1321 = vmatpush2.msra.mxu0 0.0
        %1322 = vmatprep.subr.mxu0 0.0
        %1323 = vmatpush2.msra.mxu0 0.0
        %1324 = vmatprep.subr.mxu0 0.0
        %1325 = vmatpush2.msra.mxu0 0.0
        %1326 = vmatprep.subr.mxu0 0.0
        %1327 = vmatpush2.msra.mxu0 0.0
        %1328 = vmatprep.mubr.f32.mxu0 0.0
        %v1329 = vand.u32 %v254, 4294901760
        %1330 = vmatmul.mubr.f32.gmra.mxu0 %v1329
        %v1331 = vpop.f32.mrf.mxu0
        %v1332 = vadd.f32 %v1231, %v1331
        %v1333 = vpop.f32.mrf.mxu0
        %1334 = vmatprep.mubr.f32.mxu0 0.0
        %v1335 = vand.u32 %v257, 4294901760
        %1336 = vmatmul.mubr.f32.gmra.mxu0 %v1335
        %v1337 = vpop.f32.mrf.mxu0
        %v1338 = vadd.f32 %v1239, %v1337
        %v1339 = vpop.f32.mrf.mxu0
        %1340 = vmatprep.mubr.f32.mxu0 0.0
        %v1341 = vand.u32 %v260, 4294901760
        %1342 = vmatmul.mubr.f32.gmra.mxu0 %v1341
        %v1343 = vpop.f32.mrf.mxu0
        %v1344 = vadd.f32 %v1247, %v1343
        %v1345 = vpop.f32.mrf.mxu0
        %1346 = vmatprep.mubr.f32.mxu0 0.0
        %v1347 = vand.u32 %v263, 4294901760
        %1348 = vmatmul.mubr.f32.gmra.mxu0 %v1347
        %v1349 = vpop.f32.mrf.mxu0
        %v1350 = vadd.f32 %v1255, %v1349
        %v1351 = vpop.f32.mrf.mxu0
        %1352 = vdwg.mxu0
        %1353 = vmatprep.subr.mxu0 0.0
        %1354 = vmatpush1.msra.mxu0 0.0
        %1355 = vmatprep.subr.mxu0 0.0
        %1356 = vmatpush1.msra.mxu0 0.0
        %1357 = vmatprep.subr.mxu0 0.0
        %1358 = vmatpush1.msra.mxu0 0.0
        %1359 = vmatprep.subr.mxu0 0.0
        %1360 = vmatpush1.msra.mxu0 0.0
        %1361 = vmatprep.subr.mxu0 0.0
        %1362 = vmatpush1.msra.mxu0 0.0
        %1363 = vmatprep.subr.mxu0 0.0
        %1364 = vmatpush1.msra.mxu0 0.0
        %1365 = vmatprep.subr.mxu0 0.0
        %1366 = vmatpush1.msra.mxu0 0.0
        %1367 = vmatprep.subr.mxu0 0.0
        %1368 = vmatpush1.msra.mxu0 0.0
        %1369 = vmatprep.subr.mxu0 0.0
        %1370 = vmatpush1.msra.mxu0 0.0
        %1371 = vmatprep.subr.mxu0 0.0
        %1372 = vmatpush1.msra.mxu0 0.0
        %1373 = vmatprep.subr.mxu0 0.0
        %1374 = vmatpush1.msra.mxu0 0.0
        %1375 = vmatprep.subr.mxu0 0.0
        %1376 = vmatpush1.msra.mxu0 0.0
        %1377 = vmatprep.subr.mxu0 0.0
        %1378 = vmatpush1.msra.mxu0 0.0
        %1379 = vmatprep.subr.mxu0 0.0
        %1380 = vmatpush1.msra.mxu0 0.0
        %1381 = vmatprep.subr.mxu0 0.0
        %v1382 = vand.u32 %v855, 4294901760
        %1383 = vmatpush1.msra.mxu0 %v1382
        %1384 = vmatprep.subr.mxu0 0.0
        %v1385 = vand.u32 %v854, 4294901760
        %1386 = vmatpush1.msra.mxu0 %v1385
        %1387 = vmatprep.subr.mxu0 0.0
        %1388 = vmatpush2.msra.mxu0 0.0
        %1389 = vmatprep.subr.mxu0 0.0
        %1390 = vmatpush2.msra.mxu0 0.0
        %1391 = vmatprep.subr.mxu0 0.0
        %1392 = vmatpush2.msra.mxu0 0.0
        %1393 = vmatprep.subr.mxu0 0.0
        %1394 = vmatpush2.msra.mxu0 0.0
        %1395 = vmatprep.subr.mxu0 0.0
        %1396 = vmatpush2.msra.mxu0 0.0
        %1397 = vmatprep.subr.mxu0 0.0
        %1398 = vmatpush2.msra.mxu0 0.0
        %1399 = vmatprep.subr.mxu0 0.0
        %1400 = vmatpush2.msra.mxu0 0.0
        %1401 = vmatprep.subr.mxu0 0.0
        %1402 = vmatpush2.msra.mxu0 0.0
        %1403 = vmatprep.subr.mxu0 0.0
        %1404 = vmatpush2.msra.mxu0 0.0
        %1405 = vmatprep.subr.mxu0 0.0
        %1406 = vmatpush2.msra.mxu0 0.0
        %1407 = vmatprep.subr.mxu0 0.0
        %1408 = vmatpush2.msra.mxu0 0.0
        %1409 = vmatprep.subr.mxu0 0.0
        %1410 = vmatpush2.msra.mxu0 0.0
        %1411 = vmatprep.subr.mxu0 0.0
        %1412 = vmatpush2.msra.mxu0 0.0
        %1413 = vmatprep.subr.mxu0 0.0
        %1414 = vmatpush2.msra.mxu0 0.0
        %1415 = vmatprep.subr.mxu0 0.0
        %1416 = vmatpush2.msra.mxu0 0.0
        %1417 = vmatprep.subr.mxu0 0.0
        %1418 = vmatpush2.msra.mxu0 0.0
        %1419 = vmatprep.mubr.f32.mxu0 0.0
        %v1420 = vand.u32 %v254, 4294901760
        %1421 = vmatmul.mubr.f32.gmra.mxu0 %v1420
        %v1422 = vpop.f32.mrf.mxu0
        %v1423 = vadd.f32 %v1332, %v1422
        %v1424 = vpop.f32.mrf.mxu0
        %1425 = vmatprep.mubr.f32.mxu0 0.0
        %v1426 = vand.u32 %v257, 4294901760
        %1427 = vmatmul.mubr.f32.gmra.mxu0 %v1426
        %v1428 = vpop.f32.mrf.mxu0
        %v1429 = vadd.f32 %v1338, %v1428
        %v1430 = vpop.f32.mrf.mxu0
        %1431 = vmatprep.mubr.f32.mxu0 0.0
        %v1432 = vand.u32 %v260, 4294901760
        %1433 = vmatmul.mubr.f32.gmra.mxu0 %v1432
        %v1434 = vpop.f32.mrf.mxu0
        %v1435 = vadd.f32 %v1344, %v1434
        %v1436 = vpop.f32.mrf.mxu0
        %1437 = vmatprep.mubr.f32.mxu0 0.0
        %v1438 = vand.u32 %v263, 4294901760
        %1439 = vmatmul.mubr.f32.gmra.mxu0 %v1438
        %v1440 = vpop.f32.mrf.mxu0
        %v1441 = vadd.f32 %v1350, %v1440
        %v1442 = vpop.f32.mrf.mxu0
        %1443 = vdwg.mxu0
        %v1444 = vmax.f32 %v832, %v1423
        %v1445 = vmax.f32 %v838, %v1429
        %v1446 = vmax.f32 %v844, %v1435
        %v1447 = vmax.f32 %v850, %v1441
        %s1448 = scalar_lea.vmem %s2, 32
        %v1449 = vld [vmem:[%s1448] sm:$0xff]
        %v1450 = vld [vmem:[%s1448 + $0x8] sm:$0xff]
        %v1452 = vsel %vm252, %v246, 0
        %v1455 = vsel %vm252, %v247, 0
        %v1458 = vsel %vm252, %v248, 0
        %v1461 = vsel %vm252, %v249, 0
        %1463 = vmatprep.subr.mxu0 0.0
        %1464 = vmatpush1.msra.mxu0 0.0
        %1465 = vmatprep.subr.mxu0 0.0
        %1466 = vmatpush1.msra.mxu0 0.0
        %1467 = vmatprep.subr.mxu0 0.0
        %1468 = vmatpush1.msra.mxu0 0.0
        %1469 = vmatprep.subr.mxu0 0.0
        %1470 = vmatpush1.msra.mxu0 0.0
        %1471 = vmatprep.subr.mxu0 0.0
        %1472 = vmatpush1.msra.mxu0 0.0
        %1473 = vmatprep.subr.mxu0 0.0
        %1474 = vmatpush1.msra.mxu0 0.0
        %1475 = vmatprep.subr.mxu0 0.0
        %1476 = vmatpush1.msra.mxu0 0.0
        %1477 = vmatprep.subr.mxu0 0.0
        %1478 = vmatpush1.msra.mxu0 0.0
        %1479 = vmatprep.subr.mxu0 0.0
        %1480 = vmatpush1.msra.mxu0 0.0
        %1481 = vmatprep.subr.mxu0 0.0
        %1482 = vmatpush1.msra.mxu0 0.0
        %1483 = vmatprep.subr.mxu0 0.0
        %1484 = vmatpush1.msra.mxu0 0.0
        %1485 = vmatprep.subr.mxu0 0.0
        %1486 = vmatpush1.msra.mxu0 0.0
        %1487 = vmatprep.subr.mxu0 0.0
        %1488 = vmatpush1.msra.mxu0 0.0
        %1489 = vmatprep.subr.mxu0 0.0
        %1490 = vmatpush1.msra.mxu0 0.0
        %1491 = vmatprep.subr.mxu0 0.0
        %v1492 = vand.u32 %v1450, 4294901760
        %1493 = vmatpush1.msra.mxu0 %v1492
        %1494 = vmatprep.subr.mxu0 0.0
        %v1495 = vand.u32 %v1449, 4294901760
        %1496 = vmatpush1.msra.mxu0 %v1495
        %1497 = vmatprep.subr.mxu0 0.0
        %1498 = vmatpush2.msra.mxu0 0.0
        %1499 = vmatprep.subr.mxu0 0.0
        %1500 = vmatpush2.msra.mxu0 0.0
        %1501 = vmatprep.subr.mxu0 0.0
        %1502 = vmatpush2.msra.mxu0 0.0
        %1503 = vmatprep.subr.mxu0 0.0
        %1504 = vmatpush2.msra.mxu0 0.0
        %1505 = vmatprep.subr.mxu0 0.0
        %1506 = vmatpush2.msra.mxu0 0.0
        %1507 = vmatprep.subr.mxu0 0.0
        %1508 = vmatpush2.msra.mxu0 0.0
        %1509 = vmatprep.subr.mxu0 0.0
        %1510 = vmatpush2.msra.mxu0 0.0
        %1511 = vmatprep.subr.mxu0 0.0
        %1512 = vmatpush2.msra.mxu0 0.0
        %1513 = vmatprep.subr.mxu0 0.0
        %1514 = vmatpush2.msra.mxu0 0.0
        %1515 = vmatprep.subr.mxu0 0.0
        %1516 = vmatpush2.msra.mxu0 0.0
        %1517 = vmatprep.subr.mxu0 0.0
        %1518 = vmatpush2.msra.mxu0 0.0
        %1519 = vmatprep.subr.mxu0 0.0
        %1520 = vmatpush2.msra.mxu0 0.0
        %1521 = vmatprep.subr.mxu0 0.0
        %1522 = vmatpush2.msra.mxu0 0.0
        %1523 = vmatprep.subr.mxu0 0.0
        %1524 = vmatpush2.msra.mxu0 0.0
        %1525 = vmatprep.subr.mxu0 0.0
        %1526 = vmatpush2.msra.mxu0 0.0
        %1527 = vmatprep.subr.mxu0 0.0
        %1528 = vmatpush2.msra.mxu0 0.0
        %1529 = vmatprep.mubr.f32.mxu0 0.0
        %v1530 = vand.u32 %v1452, 4294901760
        %v1531 = vsub.f32 %v1452, %v1530
        %v1532 = vand.u32 %v1531, 4294901760
        %v1533 = vsub.f32 %v1531, %v1532
        %v1534 = vand.u32 %v1533, 4294901760
        %1535 = vmatmul.mubr.f32.gmra.mxu0 %v1534
        %v1536 = vpop.f32.mrf.mxu0
        %v1537 = vadd.f32 0.0, %v1536
        %v1538 = vpop.f32.mrf.mxu0
        %1539 = vmatprep.mubr.f32.mxu0 0.0
        %v1540 = vand.u32 %v1455, 4294901760
        %v1541 = vsub.f32 %v1455, %v1540
        %v1542 = vand.u32 %v1541, 4294901760
        %v1543 = vsub.f32 %v1541, %v1542
        %v1544 = vand.u32 %v1543, 4294901760
        %1545 = vmatmul.mubr.f32.gmra.mxu0 %v1544
        %v1546 = vpop.f32.mrf.mxu0
        %v1547 = vadd.f32 0.0, %v1546
        %v1548 = vpop.f32.mrf.mxu0
        %1549 = vmatprep.mubr.f32.mxu0 0.0
        %v1550 = vand.u32 %v1458, 4294901760
        %v1551 = vsub.f32 %v1458, %v1550
        %v1552 = vand.u32 %v1551, 4294901760
        %v1553 = vsub.f32 %v1551, %v1552
        %v1554 = vand.u32 %v1553, 4294901760
        %1555 = vmatmul.mubr.f32.gmra.mxu0 %v1554
        %v1556 = vpop.f32.mrf.mxu0
        %v1557 = vadd.f32 0.0, %v1556
        %v1558 = vpop.f32.mrf.mxu0
        %1559 = vmatprep.mubr.f32.mxu0 0.0
        %v1560 = vand.u32 %v1461, 4294901760
        %v1561 = vsub.f32 %v1461, %v1560
        %v1562 = vand.u32 %v1561, 4294901760
        %v1563 = vsub.f32 %v1561, %v1562
        %v1564 = vand.u32 %v1563, 4294901760
        %1565 = vmatmul.mubr.f32.gmra.mxu0 %v1564
        %v1566 = vpop.f32.mrf.mxu0
        %v1567 = vadd.f32 0.0, %v1566
        %v1568 = vpop.f32.mrf.mxu0
        %1569 = vdwg.mxu0
        %1570 = vmatprep.subr.mxu0 0.0
        %1571 = vmatpush1.msra.mxu0 0.0
        %1572 = vmatprep.subr.mxu0 0.0
        %1573 = vmatpush1.msra.mxu0 0.0
        %1574 = vmatprep.subr.mxu0 0.0
        %1575 = vmatpush1.msra.mxu0 0.0
        %1576 = vmatprep.subr.mxu0 0.0
        %1577 = vmatpush1.msra.mxu0 0.0
        %1578 = vmatprep.subr.mxu0 0.0
        %1579 = vmatpush1.msra.mxu0 0.0
        %1580 = vmatprep.subr.mxu0 0.0
        %1581 = vmatpush1.msra.mxu0 0.0
        %1582 = vmatprep.subr.mxu0 0.0
        %1583 = vmatpush1.msra.mxu0 0.0
        %1584 = vmatprep.subr.mxu0 0.0
        %1585 = vmatpush1.msra.mxu0 0.0
        %1586 = vmatprep.subr.mxu0 0.0
        %1587 = vmatpush1.msra.mxu0 0.0
        %1588 = vmatprep.subr.mxu0 0.0
        %1589 = vmatpush1.msra.mxu0 0.0
        %1590 = vmatprep.subr.mxu0 0.0
        %1591 = vmatpush1.msra.mxu0 0.0
        %1592 = vmatprep.subr.mxu0 0.0
        %1593 = vmatpush1.msra.mxu0 0.0
        %1594 = vmatprep.subr.mxu0 0.0
        %1595 = vmatpush1.msra.mxu0 0.0
        %1596 = vmatprep.subr.mxu0 0.0
        %1597 = vmatpush1.msra.mxu0 0.0
        %1598 = vmatprep.subr.mxu0 0.0
        %v1599 = vand.u32 %v1450, 4294901760
        %v1600 = vsub.f32 %v1450, %v1599
        %v1601 = vand.u32 %v1600, 4294901760
        %v1602 = vsub.f32 %v1600, %v1601
        %v1603 = vand.u32 %v1602, 4294901760
        %1604 = vmatpush1.msra.mxu0 %v1603
        %1605 = vmatprep.subr.mxu0 0.0
        %v1606 = vand.u32 %v1449, 4294901760
        %v1607 = vsub.f32 %v1449, %v1606
        %v1608 = vand.u32 %v1607, 4294901760
        %v1609 = vsub.f32 %v1607, %v1608
        %v1610 = vand.u32 %v1609, 4294901760
        %1611 = vmatpush1.msra.mxu0 %v1610
        %1612 = vmatprep.subr.mxu0 0.0
        %1613 = vmatpush2.msra.mxu0 0.0
        %1614 = vmatprep.subr.mxu0 0.0
        %1615 = vmatpush2.msra.mxu0 0.0
        %1616 = vmatprep.subr.mxu0 0.0
        %1617 = vmatpush2.msra.mxu0 0.0
        %1618 = vmatprep.subr.mxu0 0.0
        %1619 = vmatpush2.msra.mxu0 0.0
        %1620 = vmatprep.subr.mxu0 0.0
        %1621 = vmatpush2.msra.mxu0 0.0
        %1622 = vmatprep.subr.mxu0 0.0
        %1623 = vmatpush2.msra.mxu0 0.0
        %1624 = vmatprep.subr.mxu0 0.0
        %1625 = vmatpush2.msra.mxu0 0.0
        %1626 = vmatprep.subr.mxu0 0.0
        %1627 = vmatpush2.msra.mxu0 0.0
        %1628 = vmatprep.subr.mxu0 0.0
        %1629 = vmatpush2.msra.mxu0 0.0
        %1630 = vmatprep.subr.mxu0 0.0
        %1631 = vmatpush2.msra.mxu0 0.0
        %1632 = vmatprep.subr.mxu0 0.0
        %1633 = vmatpush2.msra.mxu0 0.0
        %1634 = vmatprep.subr.mxu0 0.0
        %1635 = vmatpush2.msra.mxu0 0.0
        %1636 = vmatprep.subr.mxu0 0.0
        %1637 = vmatpush2.msra.mxu0 0.0
        %1638 = vmatprep.subr.mxu0 0.0
        %1639 = vmatpush2.msra.mxu0 0.0
        %1640 = vmatprep.subr.mxu0 0.0
        %1641 = vmatpush2.msra.mxu0 0.0
        %1642 = vmatprep.subr.mxu0 0.0
        %1643 = vmatpush2.msra.mxu0 0.0
        %1644 = vmatprep.mubr.f32.mxu0 0.0
        %v1645 = vand.u32 %v1452, 4294901760
        %1646 = vmatmul.mubr.f32.gmra.mxu0 %v1645
        %v1647 = vpop.f32.mrf.mxu0
        %v1648 = vadd.f32 %v1537, %v1647
        %v1649 = vpop.f32.mrf.mxu0
        %1650 = vmatprep.mubr.f32.mxu0 0.0
        %v1651 = vand.u32 %v1455, 4294901760
        %1652 = vmatmul.mubr.f32.gmra.mxu0 %v1651
        %v1653 = vpop.f32.mrf.mxu0
        %v1654 = vadd.f32 %v1547, %v1653
        %v1655 = vpop.f32.mrf.mxu0
        %1656 = vmatprep.mubr.f32.mxu0 0.0
        %v1657 = vand.u32 %v1458, 4294901760
        %1658 = vmatmul.mubr.f32.gmra.mxu0 %v1657
        %v1659 = vpop.f32.mrf.mxu0
        %v1660 = vadd.f32 %v1557, %v1659
        %v1661 = vpop.f32.mrf.mxu0
        %1662 = vmatprep.mubr.f32.mxu0 0.0
        %v1663 = vand.u32 %v1461, 4294901760
        %1664 = vmatmul.mubr.f32.gmra.mxu0 %v1663
        %v1665 = vpop.f32.mrf.mxu0
        %v1666 = vadd.f32 %v1567, %v1665
        %v1667 = vpop.f32.mrf.mxu0
        %1668 = vdwg.mxu0
        %1669 = vmatprep.subr.mxu0 0.0
        %1670 = vmatpush1.msra.mxu0 0.0
        %1671 = vmatprep.subr.mxu0 0.0
        %1672 = vmatpush1.msra.mxu0 0.0
        %1673 = vmatprep.subr.mxu0 0.0
        %1674 = vmatpush1.msra.mxu0 0.0
        %1675 = vmatprep.subr.mxu0 0.0
        %1676 = vmatpush1.msra.mxu0 0.0
        %1677 = vmatprep.subr.mxu0 0.0
        %1678 = vmatpush1.msra.mxu0 0.0
        %1679 = vmatprep.subr.mxu0 0.0
        %1680 = vmatpush1.msra.mxu0 0.0
        %1681 = vmatprep.subr.mxu0 0.0
        %1682 = vmatpush1.msra.mxu0 0.0
        %1683 = vmatprep.subr.mxu0 0.0
        %1684 = vmatpush1.msra.mxu0 0.0
        %1685 = vmatprep.subr.mxu0 0.0
        %1686 = vmatpush1.msra.mxu0 0.0
        %1687 = vmatprep.subr.mxu0 0.0
        %1688 = vmatpush1.msra.mxu0 0.0
        %1689 = vmatprep.subr.mxu0 0.0
        %1690 = vmatpush1.msra.mxu0 0.0
        %1691 = vmatprep.subr.mxu0 0.0
        %1692 = vmatpush1.msra.mxu0 0.0
        %1693 = vmatprep.subr.mxu0 0.0
        %1694 = vmatpush1.msra.mxu0 0.0
        %1695 = vmatprep.subr.mxu0 0.0
        %1696 = vmatpush1.msra.mxu0 0.0
        %1697 = vmatprep.subr.mxu0 0.0
        %v1698 = vand.u32 %v1450, 4294901760
        %v1699 = vsub.f32 %v1450, %v1698
        %1700 = vmatpush1.msra.mxu0 %v1699
        %1701 = vmatprep.subr.mxu0 0.0
        %v1702 = vand.u32 %v1449, 4294901760
        %v1703 = vsub.f32 %v1449, %v1702
        %1704 = vmatpush1.msra.mxu0 %v1703
        %1705 = vmatprep.subr.mxu0 0.0
        %1706 = vmatpush2.msra.mxu0 0.0
        %1707 = vmatprep.subr.mxu0 0.0
        %1708 = vmatpush2.msra.mxu0 0.0
        %1709 = vmatprep.subr.mxu0 0.0
        %1710 = vmatpush2.msra.mxu0 0.0
        %1711 = vmatprep.subr.mxu0 0.0
        %1712 = vmatpush2.msra.mxu0 0.0
        %1713 = vmatprep.subr.mxu0 0.0
        %1714 = vmatpush2.msra.mxu0 0.0
        %1715 = vmatprep.subr.mxu0 0.0
        %1716 = vmatpush2.msra.mxu0 0.0
        %1717 = vmatprep.subr.mxu0 0.0
        %1718 = vmatpush2.msra.mxu0 0.0
        %1719 = vmatprep.subr.mxu0 0.0
        %1720 = vmatpush2.msra.mxu0 0.0
        %1721 = vmatprep.subr.mxu0 0.0
        %1722 = vmatpush2.msra.mxu0 0.0
        %1723 = vmatprep.subr.mxu0 0.0
        %1724 = vmatpush2.msra.mxu0 0.0
        %1725 = vmatprep.subr.mxu0 0.0
        %1726 = vmatpush2.msra.mxu0 0.0
        %1727 = vmatprep.subr.mxu0 0.0
        %1728 = vmatpush2.msra.mxu0 0.0
        %1729 = vmatprep.subr.mxu0 0.0
        %1730 = vmatpush2.msra.mxu0 0.0
        %1731 = vmatprep.subr.mxu0 0.0
        %1732 = vmatpush2.msra.mxu0 0.0
        %1733 = vmatprep.subr.mxu0 0.0
        %1734 = vmatpush2.msra.mxu0 0.0
        %1735 = vmatprep.subr.mxu0 0.0
        %1736 = vmatpush2.msra.mxu0 0.0
        %1737 = vmatprep.mubr.f32.mxu0 0.0
        %v1738 = vand.u32 %v1452, 4294901760
        %v1739 = vsub.f32 %v1452, %v1738
        %1740 = vmatmul.mubr.f32.gmra.mxu0 %v1739
        %v1741 = vpop.f32.mrf.mxu0
        %v1742 = vadd.f32 %v1648, %v1741
        %v1743 = vpop.f32.mrf.mxu0
        %1744 = vmatprep.mubr.f32.mxu0 0.0
        %v1745 = vand.u32 %v1455, 4294901760
        %v1746 = vsub.f32 %v1455, %v1745
        %1747 = vmatmul.mubr.f32.gmra.mxu0 %v1746
        %v1748 = vpop.f32.mrf.mxu0
        %v1749 = vadd.f32 %v1654, %v1748
        %v1750 = vpop.f32.mrf.mxu0
        %1751 = vmatprep.mubr.f32.mxu0 0.0
        %v1752 = vand.u32 %v1458, 4294901760
        %v1753 = vsub.f32 %v1458, %v1752
        %1754 = vmatmul.mubr.f32.gmra.mxu0 %v1753
        %v1755 = vpop.f32.mrf.mxu0
        %v1756 = vadd.f32 %v1660, %v1755
        %v1757 = vpop.f32.mrf.mxu0
        %1758 = vmatprep.mubr.f32.mxu0 0.0
        %v1759 = vand.u32 %v1461, 4294901760
        %v1760 = vsub.f32 %v1461, %v1759
        %1761 = vmatmul.mubr.f32.gmra.mxu0 %v1760
        %v1762 = vpop.f32.mrf.mxu0
        %v1763 = vadd.f32 %v1666, %v1762
        %v1764 = vpop.f32.mrf.mxu0
        %1765 = vdwg.mxu0
        %1766 = vmatprep.subr.mxu0 0.0
        %1767 = vmatpush1.msra.mxu0 0.0
        %1768 = vmatprep.subr.mxu0 0.0
        %1769 = vmatpush1.msra.mxu0 0.0
        %1770 = vmatprep.subr.mxu0 0.0
        %1771 = vmatpush1.msra.mxu0 0.0
        %1772 = vmatprep.subr.mxu0 0.0
        %1773 = vmatpush1.msra.mxu0 0.0
        %1774 = vmatprep.subr.mxu0 0.0
        %1775 = vmatpush1.msra.mxu0 0.0
        %1776 = vmatprep.subr.mxu0 0.0
        %1777 = vmatpush1.msra.mxu0 0.0
        %1778 = vmatprep.subr.mxu0 0.0
        %1779 = vmatpush1.msra.mxu0 0.0
        %1780 = vmatprep.subr.mxu0 0.0
        %1781 = vmatpush1.msra.mxu0 0.0
        %1782 = vmatprep.subr.mxu0 0.0
        %1783 = vmatpush1.msra.mxu0 0.0
        %1784 = vmatprep.subr.mxu0 0.0
        %1785 = vmatpush1.msra.mxu0 0.0
        %1786 = vmatprep.subr.mxu0 0.0
        %1787 = vmatpush1.msra.mxu0 0.0
        %1788 = vmatprep.subr.mxu0 0.0
        %1789 = vmatpush1.msra.mxu0 0.0
        %1790 = vmatprep.subr.mxu0 0.0
        %1791 = vmatpush1.msra.mxu0 0.0
        %1792 = vmatprep.subr.mxu0 0.0
        %1793 = vmatpush1.msra.mxu0 0.0
        %1794 = vmatprep.subr.mxu0 0.0
        %v1795 = vand.u32 %v1450, 4294901760
        %1796 = vmatpush1.msra.mxu0 %v1795
        %1797 = vmatprep.subr.mxu0 0.0
        %v1798 = vand.u32 %v1449, 4294901760
        %1799 = vmatpush1.msra.mxu0 %v1798
        %1800 = vmatprep.subr.mxu0 0.0
        %1801 = vmatpush2.msra.mxu0 0.0
        %1802 = vmatprep.subr.mxu0 0.0
        %1803 = vmatpush2.msra.mxu0 0.0
        %1804 = vmatprep.subr.mxu0 0.0
        %1805 = vmatpush2.msra.mxu0 0.0
        %1806 = vmatprep.subr.mxu0 0.0
        %1807 = vmatpush2.msra.mxu0 0.0
        %1808 = vmatprep.subr.mxu0 0.0
        %1809 = vmatpush2.msra.mxu0 0.0
        %1810 = vmatprep.subr.mxu0 0.0
        %1811 = vmatpush2.msra.mxu0 0.0
        %1812 = vmatprep.subr.mxu0 0.0
        %1813 = vmatpush2.msra.mxu0 0.0
        %1814 = vmatprep.subr.mxu0 0.0
        %1815 = vmatpush2.msra.mxu0 0.0
        %1816 = vmatprep.subr.mxu0 0.0
        %1817 = vmatpush2.msra.mxu0 0.0
        %1818 = vmatprep.subr.mxu0 0.0
        %1819 = vmatpush2.msra.mxu0 0.0
        %1820 = vmatprep.subr.mxu0 0.0
        %1821 = vmatpush2.msra.mxu0 0.0
        %1822 = vmatprep.subr.mxu0 0.0
        %1823 = vmatpush2.msra.mxu0 0.0
        %1824 = vmatprep.subr.mxu0 0.0
        %1825 = vmatpush2.msra.mxu0 0.0
        %1826 = vmatprep.subr.mxu0 0.0
        %1827 = vmatpush2.msra.mxu0 0.0
        %1828 = vmatprep.subr.mxu0 0.0
        %1829 = vmatpush2.msra.mxu0 0.0
        %1830 = vmatprep.subr.mxu0 0.0
        %1831 = vmatpush2.msra.mxu0 0.0
        %1832 = vmatprep.mubr.f32.mxu0 0.0
        %v1833 = vand.u32 %v1452, 4294901760
        %v1834 = vsub.f32 %v1452, %v1833
        %v1835 = vand.u32 %v1834, 4294901760
        %1836 = vmatmul.mubr.f32.gmra.mxu0 %v1835
        %v1837 = vpop.f32.mrf.mxu0
        %v1838 = vadd.f32 %v1742, %v1837
        %v1839 = vpop.f32.mrf.mxu0
        %1840 = vmatprep.mubr.f32.mxu0 0.0
        %v1841 = vand.u32 %v1455, 4294901760
        %v1842 = vsub.f32 %v1455, %v1841
        %v1843 = vand.u32 %v1842, 4294901760
        %1844 = vmatmul.mubr.f32.gmra.mxu0 %v1843
        %v1845 = vpop.f32.mrf.mxu0
        %v1846 = vadd.f32 %v1749, %v1845
        %v1847 = vpop.f32.mrf.mxu0
        %1848 = vmatprep.mubr.f32.mxu0 0.0
        %v1849 = vand.u32 %v1458, 4294901760
        %v1850 = vsub.f32 %v1458, %v1849
        %v1851 = vand.u32 %v1850, 4294901760
        %1852 = vmatmul.mubr.f32.gmra.mxu0 %v1851
        %v1853 = vpop.f32.mrf.mxu0
        %v1854 = vadd.f32 %v1756, %v1853
        %v1855 = vpop.f32.mrf.mxu0
        %1856 = vmatprep.mubr.f32.mxu0 0.0
        %v1857 = vand.u32 %v1461, 4294901760
        %v1858 = vsub.f32 %v1461, %v1857
        %v1859 = vand.u32 %v1858, 4294901760
        %1860 = vmatmul.mubr.f32.gmra.mxu0 %v1859
        %v1861 = vpop.f32.mrf.mxu0
        %v1862 = vadd.f32 %v1763, %v1861
        %v1863 = vpop.f32.mrf.mxu0
        %1864 = vdwg.mxu0
        %1865 = vmatprep.subr.mxu0 0.0
        %1866 = vmatpush1.msra.mxu0 0.0
        %1867 = vmatprep.subr.mxu0 0.0
        %1868 = vmatpush1.msra.mxu0 0.0
        %1869 = vmatprep.subr.mxu0 0.0
        %1870 = vmatpush1.msra.mxu0 0.0
        %1871 = vmatprep.subr.mxu0 0.0
        %1872 = vmatpush1.msra.mxu0 0.0
        %1873 = vmatprep.subr.mxu0 0.0
        %1874 = vmatpush1.msra.mxu0 0.0
        %1875 = vmatprep.subr.mxu0 0.0
        %1876 = vmatpush1.msra.mxu0 0.0
        %1877 = vmatprep.subr.mxu0 0.0
        %1878 = vmatpush1.msra.mxu0 0.0
        %1879 = vmatprep.subr.mxu0 0.0
        %1880 = vmatpush1.msra.mxu0 0.0
        %1881 = vmatprep.subr.mxu0 0.0
        %1882 = vmatpush1.msra.mxu0 0.0
        %1883 = vmatprep.subr.mxu0 0.0
        %1884 = vmatpush1.msra.mxu0 0.0
        %1885 = vmatprep.subr.mxu0 0.0
        %1886 = vmatpush1.msra.mxu0 0.0
        %1887 = vmatprep.subr.mxu0 0.0
        %1888 = vmatpush1.msra.mxu0 0.0
        %1889 = vmatprep.subr.mxu0 0.0
        %1890 = vmatpush1.msra.mxu0 0.0
        %1891 = vmatprep.subr.mxu0 0.0
        %1892 = vmatpush1.msra.mxu0 0.0
        %1893 = vmatprep.subr.mxu0 0.0
        %v1894 = vand.u32 %v1450, 4294901760
        %v1895 = vsub.f32 %v1450, %v1894
        %v1896 = vand.u32 %v1895, 4294901760
        %1897 = vmatpush1.msra.mxu0 %v1896
        %1898 = vmatprep.subr.mxu0 0.0
        %v1899 = vand.u32 %v1449, 4294901760
        %v1900 = vsub.f32 %v1449, %v1899
        %v1901 = vand.u32 %v1900, 4294901760
        %1902 = vmatpush1.msra.mxu0 %v1901
        %1903 = vmatprep.subr.mxu0 0.0
        %1904 = vmatpush2.msra.mxu0 0.0
        %1905 = vmatprep.subr.mxu0 0.0
        %1906 = vmatpush2.msra.mxu0 0.0
        %1907 = vmatprep.subr.mxu0 0.0
        %1908 = vmatpush2.msra.mxu0 0.0
        %1909 = vmatprep.subr.mxu0 0.0
        %1910 = vmatpush2.msra.mxu0 0.0
        %1911 = vmatprep.subr.mxu0 0.0
        %1912 = vmatpush2.msra.mxu0 0.0
        %1913 = vmatprep.subr.mxu0 0.0
        %1914 = vmatpush2.msra.mxu0 0.0
        %1915 = vmatprep.subr.mxu0 0.0
        %1916 = vmatpush2.msra.mxu0 0.0
        %1917 = vmatprep.subr.mxu0 0.0
        %1918 = vmatpush2.msra.mxu0 0.0
        %1919 = vmatprep.subr.mxu0 0.0
        %1920 = vmatpush2.msra.mxu0 0.0
        %1921 = vmatprep.subr.mxu0 0.0
        %1922 = vmatpush2.msra.mxu0 0.0
        %1923 = vmatprep.subr.mxu0 0.0
        %1924 = vmatpush2.msra.mxu0 0.0
        %1925 = vmatprep.subr.mxu0 0.0
        %1926 = vmatpush2.msra.mxu0 0.0
        %1927 = vmatprep.subr.mxu0 0.0
        %1928 = vmatpush2.msra.mxu0 0.0
        %1929 = vmatprep.subr.mxu0 0.0
        %1930 = vmatpush2.msra.mxu0 0.0
        %1931 = vmatprep.subr.mxu0 0.0
        %1932 = vmatpush2.msra.mxu0 0.0
        %1933 = vmatprep.subr.mxu0 0.0
        %1934 = vmatpush2.msra.mxu0 0.0
        %1935 = vmatprep.mubr.f32.mxu0 0.0
        %v1936 = vand.u32 %v1452, 4294901760
        %1937 = vmatmul.mubr.f32.gmra.mxu0 %v1936
        %v1938 = vpop.f32.mrf.mxu0
        %v1939 = vadd.f32 %v1838, %v1938
        %v1940 = vpop.f32.mrf.mxu0
        %1941 = vmatprep.mubr.f32.mxu0 0.0
        %v1942 = vand.u32 %v1455, 4294901760
        %1943 = vmatmul.mubr.f32.gmra.mxu0 %v1942
        %v1944 = vpop.f32.mrf.mxu0
        %v1945 = vadd.f32 %v1846, %v1944
        %v1946 = vpop.f32.mrf.mxu0
        %1947 = vmatprep.mubr.f32.mxu0 0.0
        %v1948 = vand.u32 %v1458, 4294901760
        %1949 = vmatmul.mubr.f32.gmra.mxu0 %v1948
        %v1950 = vpop.f32.mrf.mxu0
        %v1951 = vadd.f32 %v1854, %v1950
        %v1952 = vpop.f32.mrf.mxu0
        %1953 = vmatprep.mubr.f32.mxu0 0.0
        %v1954 = vand.u32 %v1461, 4294901760
        %1955 = vmatmul.mubr.f32.gmra.mxu0 %v1954
        %v1956 = vpop.f32.mrf.mxu0
        %v1957 = vadd.f32 %v1862, %v1956
        %v1958 = vpop.f32.mrf.mxu0
        %1959 = vdwg.mxu0
        %1960 = vmatprep.subr.mxu0 0.0
        %1961 = vmatpush1.msra.mxu0 0.0
        %1962 = vmatprep.subr.mxu0 0.0
        %1963 = vmatpush1.msra.mxu0 0.0
        %1964 = vmatprep.subr.mxu0 0.0
        %1965 = vmatpush1.msra.mxu0 0.0
        %1966 = vmatprep.subr.mxu0 0.0
        %1967 = vmatpush1.msra.mxu0 0.0
        %1968 = vmatprep.subr.mxu0 0.0
        %1969 = vmatpush1.msra.mxu0 0.0
        %1970 = vmatprep.subr.mxu0 0.0
        %1971 = vmatpush1.msra.mxu0 0.0
        %1972 = vmatprep.subr.mxu0 0.0
        %1973 = vmatpush1.msra.mxu0 0.0
        %1974 = vmatprep.subr.mxu0 0.0
        %1975 = vmatpush1.msra.mxu0 0.0
        %1976 = vmatprep.subr.mxu0 0.0
        %1977 = vmatpush1.msra.mxu0 0.0
        %1978 = vmatprep.subr.mxu0 0.0
        %1979 = vmatpush1.msra.mxu0 0.0
        %1980 = vmatprep.subr.mxu0 0.0
        %1981 = vmatpush1.msra.mxu0 0.0
        %1982 = vmatprep.subr.mxu0 0.0
        %1983 = vmatpush1.msra.mxu0 0.0
        %1984 = vmatprep.subr.mxu0 0.0
        %1985 = vmatpush1.msra.mxu0 0.0
        %1986 = vmatprep.subr.mxu0 0.0
        %1987 = vmatpush1.msra.mxu0 0.0
        %1988 = vmatprep.subr.mxu0 0.0
        %v1989 = vand.u32 %v1450, 4294901760
        %1990 = vmatpush1.msra.mxu0 %v1989
        %1991 = vmatprep.subr.mxu0 0.0
        %v1992 = vand.u32 %v1449, 4294901760
        %1993 = vmatpush1.msra.mxu0 %v1992
        %1994 = vmatprep.subr.mxu0 0.0
        %1995 = vmatpush2.msra.mxu0 0.0
        %1996 = vmatprep.subr.mxu0 0.0
        %1997 = vmatpush2.msra.mxu0 0.0
        %1998 = vmatprep.subr.mxu0 0.0
        %1999 = vmatpush2.msra.mxu0 0.0
        %2000 = vmatprep.subr.mxu0 0.0
        %2001 = vmatpush2.msra.mxu0 0.0
        %2002 = vmatprep.subr.mxu0 0.0
        %2003 = vmatpush2.msra.mxu0 0.0
        %2004 = vmatprep.subr.mxu0 0.0
        %2005 = vmatpush2.msra.mxu0 0.0
        %2006 = vmatprep.subr.mxu0 0.0
        %2007 = vmatpush2.msra.mxu0 0.0
        %2008 = vmatprep.subr.mxu0 0.0
        %2009 = vmatpush2.msra.mxu0 0.0
        %2010 = vmatprep.subr.mxu0 0.0
        %2011 = vmatpush2.msra.mxu0 0.0
        %2012 = vmatprep.subr.mxu0 0.0
        %2013 = vmatpush2.msra.mxu0 0.0
        %2014 = vmatprep.subr.mxu0 0.0
        %2015 = vmatpush2.msra.mxu0 0.0
        %2016 = vmatprep.subr.mxu0 0.0
        %2017 = vmatpush2.msra.mxu0 0.0
        %2018 = vmatprep.subr.mxu0 0.0
        %2019 = vmatpush2.msra.mxu0 0.0
        %2020 = vmatprep.subr.mxu0 0.0
        %2021 = vmatpush2.msra.mxu0 0.0
        %2022 = vmatprep.subr.mxu0 0.0
        %2023 = vmatpush2.msra.mxu0 0.0
        %2024 = vmatprep.subr.mxu0 0.0
        %2025 = vmatpush2.msra.mxu0 0.0
        %2026 = vmatprep.mubr.f32.mxu0 0.0
        %v2027 = vand.u32 %v1452, 4294901760
        %2028 = vmatmul.mubr.f32.gmra.mxu0 %v2027
        %v2029 = vpop.f32.mrf.mxu0
        %v2030 = vadd.f32 %v1939, %v2029
        %v2031 = vpop.f32.mrf.mxu0
        %2032 = vmatprep.mubr.f32.mxu0 0.0
        %v2033 = vand.u32 %v1455, 4294901760
        %2034 = vmatmul.mubr.f32.gmra.mxu0 %v2033
        %v2035 = vpop.f32.mrf.mxu0
        %v2036 = vadd.f32 %v1945, %v2035
        %v2037 = vpop.f32.mrf.mxu0
        %2038 = vmatprep.mubr.f32.mxu0 0.0
        %v2039 = vand.u32 %v1458, 4294901760
        %2040 = vmatmul.mubr.f32.gmra.mxu0 %v2039
        %v2041 = vpop.f32.mrf.mxu0
        %v2042 = vadd.f32 %v1951, %v2041
        %v2043 = vpop.f32.mrf.mxu0
        %2044 = vmatprep.mubr.f32.mxu0 0.0
        %v2045 = vand.u32 %v1461, 4294901760
        %2046 = vmatmul.mubr.f32.gmra.mxu0 %v2045
        %v2047 = vpop.f32.mrf.mxu0
        %v2048 = vadd.f32 %v1957, %v2047
        %v2049 = vpop.f32.mrf.mxu0
        %2050 = vdwg.mxu0
        %v2051 = vmul.f32 %v2030, 0.25
        %v2052 = vmul.f32 %v2036, 0.25
        %v2053 = vmul.f32 %v2042, 0.25
        %v2054 = vmul.f32 %v2048, 0.25
        %v2055 = vld [vmem:[%s0] sm:$0x1]
        %v2056 = vld [vmem:[%s0 + $0x1] sm:$0x1]
        %v2057 = vld [vmem:[%s0 + $0x2] sm:$0x1]
        %v2058 = vld [vmem:[%s0 + $0x3] sm:$0x1]
        %v2063 = vlaneseq
        %v2064 = vshrl.u32 %v2063, 7
        %v2065 = vsub.s32 0, %v2064
        %v2066 = vrot.slane %v2055, %v2065
        %v2067 = vlaneseq
        %v2068 = vshrl.u32 %v2067, 7
        %v2069 = vsub.s32 0, %v2068
        %v2070 = vrot.slane %v2056, %v2069
        %v2071 = vlaneseq
        %v2072 = vshrl.u32 %v2071, 7
        %v2073 = vsub.s32 0, %v2072
        %v2074 = vrot.slane %v2057, %v2073
        %v2075 = vlaneseq
        %v2076 = vshrl.u32 %v2075, 7
        %v2077 = vsub.s32 0, %v2076
        %v2078 = vrot.slane %v2058, %v2077
        %2079 = vset.pattern.permute.xlu0 0
        %2080 = vperm.xlu0 %2079, %v2066
        %v2081 = vpop.permute.xlu0 %2080
        %2083 = vset.pattern.permute.xlu0 0
        %2084 = vperm.xlu0 %2083, %v2070
        %v2085 = vpop.permute.xlu0 %2084
        %2087 = vset.pattern.permute.xlu0 0
        %2088 = vperm.xlu0 %2087, %v2074
        %v2089 = vpop.permute.xlu0 %2088
        %2091 = vset.pattern.permute.xlu0 0
        %2092 = vperm.xlu0 %2091, %v2078
        %v2093 = vpop.permute.xlu0 %2092
        %v2095 = vmul.f32 %v222, %v2081
        %v2096 = vmul.f32 %v223, %v2085
        %v2097 = vmul.f32 %v224, %v2089
        %v2098 = vmul.f32 %v225, %v2093
        %v2099 = vsel %vm252, %v2095, 0.0
        %v2100 = vsel %vm252, %v2096, 0.0
        %v2101 = vadd.f32 %v2099, %v2100
        %v2102 = vsel %vm252, %v2097, 0.0
        %v2103 = vadd.f32 %v2101, %v2102
        %v2104 = vsel %vm252, %v2098, 0.0
        %v2105 = vadd.f32 %v2103, %v2104
        %s2106 = sld [smem:[#allocation2]]
        %v2107 = vstv %s2106
        %v2109 = vsel %vm252, %v2105, 0
        %2111 = vmatprep.subr.mxu0 0.0
        %2112 = vmatpush1.msra.mxu0 0.0
        %2113 = vmatprep.subr.mxu0 0.0
        %2114 = vmatpush1.msra.mxu0 0.0
        %2115 = vmatprep.subr.mxu0 0.0
        %2116 = vmatpush1.msra.mxu0 0.0
        %2117 = vmatprep.subr.mxu0 0.0
        %2118 = vmatpush1.msra.mxu0 0.0
        %2119 = vmatprep.subr.mxu0 0.0
        %2120 = vmatpush1.msra.mxu0 0.0
        %2121 = vmatprep.subr.mxu0 0.0
        %2122 = vmatpush1.msra.mxu0 0.0
        %2123 = vmatprep.subr.mxu0 0.0
        %2124 = vmatpush1.msra.mxu0 0.0
        %2125 = vmatprep.subr.mxu0 0.0
        %2126 = vmatpush1.msra.mxu0 0.0
        %2127 = vmatprep.subr.mxu0 0.0
        %2128 = vmatpush1.msra.mxu0 0.0
        %2129 = vmatprep.subr.mxu0 0.0
        %2130 = vmatpush1.msra.mxu0 0.0
        %2131 = vmatprep.subr.mxu0 0.0
        %2132 = vmatpush1.msra.mxu0 0.0
        %2133 = vmatprep.subr.mxu0 0.0
        %2134 = vmatpush1.msra.mxu0 0.0
        %2135 = vmatprep.subr.mxu0 0.0
        %2136 = vmatpush1.msra.mxu0 0.0
        %2137 = vmatprep.subr.mxu0 0.0
        %2138 = vmatpush1.msra.mxu0 0.0
        %2139 = vmatprep.subr.mxu0 0.0
        %v2140 = vand.u32 %v251, 4294901760
        %2141 = vmatpush1.msra.mxu0 %v2140
        %2142 = vmatprep.subr.mxu0 0.0
        %v2143 = vand.u32 %v250, 4294901760
        %2144 = vmatpush1.msra.mxu0 %v2143
        %2145 = vmatprep.subr.mxu0 0.0
        %2146 = vmatpush2.msra.mxu0 0.0
        %2147 = vmatprep.subr.mxu0 0.0
        %2148 = vmatpush2.msra.mxu0 0.0
        %2149 = vmatprep.subr.mxu0 0.0
        %2150 = vmatpush2.msra.mxu0 0.0
        %2151 = vmatprep.subr.mxu0 0.0
        %2152 = vmatpush2.msra.mxu0 0.0
        %2153 = vmatprep.subr.mxu0 0.0
        %2154 = vmatpush2.msra.mxu0 0.0
        %2155 = vmatprep.subr.mxu0 0.0
        %2156 = vmatpush2.msra.mxu0 0.0
        %2157 = vmatprep.subr.mxu0 0.0
        %2158 = vmatpush2.msra.mxu0 0.0
        %2159 = vmatprep.subr.mxu0 0.0
        %2160 = vmatpush2.msra.mxu0 0.0
        %2161 = vmatprep.subr.mxu0 0.0
        %2162 = vmatpush2.msra.mxu0 0.0
        %2163 = vmatprep.subr.mxu0 0.0
        %2164 = vmatpush2.msra.mxu0 0.0
        %2165 = vmatprep.subr.mxu0 0.0
        %2166 = vmatpush2.msra.mxu0 0.0
        %2167 = vmatprep.subr.mxu0 0.0
        %2168 = vmatpush2.msra.mxu0 0.0
        %2169 = vmatprep.subr.mxu0 0.0
        %2170 = vmatpush2.msra.mxu0 0.0
        %2171 = vmatprep.subr.mxu0 0.0
        %2172 = vmatpush2.msra.mxu0 0.0
        %2173 = vmatprep.subr.mxu0 0.0
        %2174 = vmatpush2.msra.mxu0 0.0
        %2175 = vmatprep.subr.mxu0 0.0
        %2176 = vmatpush2.msra.mxu0 0.0
        %2177 = vmatprep.mubr.f32.mxu0 0.0
        %v2178 = vand.u32 %v2109, 4294901760
        %v2179 = vsub.f32 %v2109, %v2178
        %v2180 = vand.u32 %v2179, 4294901760
        %v2181 = vsub.f32 %v2179, %v2180
        %v2182 = vand.u32 %v2181, 4294901760
        %2183 = vmatmul.mubr.f32.gmra.mxu0 %v2182
        %v2184 = vpop.f32.mrf.mxu0
        %v2185 = vadd.f32 %v2107, %v2184
        %v2186 = vpop.f32.mrf.mxu0
        %2187 = vdwg.mxu0
        %2188 = vmatprep.subr.mxu0 0.0
        %2189 = vmatpush1.msra.mxu0 0.0
        %2190 = vmatprep.subr.mxu0 0.0
        %2191 = vmatpush1.msra.mxu0 0.0
        %2192 = vmatprep.subr.mxu0 0.0
        %2193 = vmatpush1.msra.mxu0 0.0
        %2194 = vmatprep.subr.mxu0 0.0
        %2195 = vmatpush1.msra.mxu0 0.0
        %2196 = vmatprep.subr.mxu0 0.0
        %2197 = vmatpush1.msra.mxu0 0.0
        %2198 = vmatprep.subr.mxu0 0.0
        %2199 = vmatpush1.msra.mxu0 0.0
        %2200 = vmatprep.subr.mxu0 0.0
        %2201 = vmatpush1.msra.mxu0 0.0
        %2202 = vmatprep.subr.mxu0 0.0
        %2203 = vmatpush1.msra.mxu0 0.0
        %2204 = vmatprep.subr.mxu0 0.0
        %2205 = vmatpush1.msra.mxu0 0.0
        %2206 = vmatprep.subr.mxu0 0.0
        %2207 = vmatpush1.msra.mxu0 0.0
        %2208 = vmatprep.subr.mxu0 0.0
        %2209 = vmatpush1.msra.mxu0 0.0
        %2210 = vmatprep.subr.mxu0 0.0
        %2211 = vmatpush1.msra.mxu0 0.0
        %2212 = vmatprep.subr.mxu0 0.0
        %2213 = vmatpush1.msra.mxu0 0.0
        %2214 = vmatprep.subr.mxu0 0.0
        %2215 = vmatpush1.msra.mxu0 0.0
        %2216 = vmatprep.subr.mxu0 0.0
        %v2217 = vand.u32 %v251, 4294901760
        %v2218 = vsub.f32 %v251, %v2217
        %v2219 = vand.u32 %v2218, 4294901760
        %v2220 = vsub.f32 %v2218, %v2219
        %v2221 = vand.u32 %v2220, 4294901760
        %2222 = vmatpush1.msra.mxu0 %v2221
        %2223 = vmatprep.subr.mxu0 0.0
        %v2224 = vand.u32 %v250, 4294901760
        %v2225 = vsub.f32 %v250, %v2224
        %v2226 = vand.u32 %v2225, 4294901760
        %v2227 = vsub.f32 %v2225, %v2226
        %v2228 = vand.u32 %v2227, 4294901760
        %2229 = vmatpush1.msra.mxu0 %v2228
        %2230 = vmatprep.subr.mxu0 0.0
        %2231 = vmatpush2.msra.mxu0 0.0
        %2232 = vmatprep.subr.mxu0 0.0
        %2233 = vmatpush2.msra.mxu0 0.0
        %2234 = vmatprep.subr.mxu0 0.0
        %2235 = vmatpush2.msra.mxu0 0.0
        %2236 = vmatprep.subr.mxu0 0.0
        %2237 = vmatpush2.msra.mxu0 0.0
        %2238 = vmatprep.subr.mxu0 0.0
        %2239 = vmatpush2.msra.mxu0 0.0
        %2240 = vmatprep.subr.mxu0 0.0
        %2241 = vmatpush2.msra.mxu0 0.0
        %2242 = vmatprep.subr.mxu0 0.0
        %2243 = vmatpush2.msra.mxu0 0.0
        %2244 = vmatprep.subr.mxu0 0.0
        %2245 = vmatpush2.msra.mxu0 0.0
        %2246 = vmatprep.subr.mxu0 0.0
        %2247 = vmatpush2.msra.mxu0 0.0
        %2248 = vmatprep.subr.mxu0 0.0
        %2249 = vmatpush2.msra.mxu0 0.0
        %2250 = vmatprep.subr.mxu0 0.0
        %2251 = vmatpush2.msra.mxu0 0.0
        %2252 = vmatprep.subr.mxu0 0.0
        %2253 = vmatpush2.msra.mxu0 0.0
        %2254 = vmatprep.subr.mxu0 0.0
        %2255 = vmatpush2.msra.mxu0 0.0
        %2256 = vmatprep.subr.mxu0 0.0
        %2257 = vmatpush2.msra.mxu0 0.0
        %2258 = vmatprep.subr.mxu0 0.0
        %2259 = vmatpush2.msra.mxu0 0.0
        %2260 = vmatprep.subr.mxu0 0.0
        %2261 = vmatpush2.msra.mxu0 0.0
        %2262 = vmatprep.mubr.f32.mxu0 0.0
        %v2263 = vand.u32 %v2109, 4294901760
        %2264 = vmatmul.mubr.f32.gmra.mxu0 %v2263
        %v2265 = vpop.f32.mrf.mxu0
        %v2266 = vadd.f32 %v2185, %v2265
        %v2267 = vpop.f32.mrf.mxu0
        %2268 = vdwg.mxu0
        %2269 = vmatprep.subr.mxu0 0.0
        %2270 = vmatpush1.msra.mxu0 0.0
        %2271 = vmatprep.subr.mxu0 0.0
        %2272 = vmatpush1.msra.mxu0 0.0
        %2273 = vmatprep.subr.mxu0 0.0
        %2274 = vmatpush1.msra.mxu0 0.0
        %2275 = vmatprep.subr.mxu0 0.0
        %2276 = vmatpush1.msra.mxu0 0.0
        %2277 = vmatprep.subr.mxu0 0.0
        %2278 = vmatpush1.msra.mxu0 0.0
        %2279 = vmatprep.subr.mxu0 0.0
        %2280 = vmatpush1.msra.mxu0 0.0
        %2281 = vmatprep.subr.mxu0 0.0
        %2282 = vmatpush1.msra.mxu0 0.0
        %2283 = vmatprep.subr.mxu0 0.0
        %2284 = vmatpush1.msra.mxu0 0.0
        %2285 = vmatprep.subr.mxu0 0.0
        %2286 = vmatpush1.msra.mxu0 0.0
        %2287 = vmatprep.subr.mxu0 0.0
        %2288 = vmatpush1.msra.mxu0 0.0
        %2289 = vmatprep.subr.mxu0 0.0
        %2290 = vmatpush1.msra.mxu0 0.0
        %2291 = vmatprep.subr.mxu0 0.0
        %2292 = vmatpush1.msra.mxu0 0.0
        %2293 = vmatprep.subr.mxu0 0.0
        %2294 = vmatpush1.msra.mxu0 0.0
        %2295 = vmatprep.subr.mxu0 0.0
        %2296 = vmatpush1.msra.mxu0 0.0
        %2297 = vmatprep.subr.mxu0 0.0
        %v2298 = vand.u32 %v251, 4294901760
        %v2299 = vsub.f32 %v251, %v2298
        %2300 = vmatpush1.msra.mxu0 %v2299
        %2301 = vmatprep.subr.mxu0 0.0
        %v2302 = vand.u32 %v250, 4294901760
        %v2303 = vsub.f32 %v250, %v2302
        %2304 = vmatpush1.msra.mxu0 %v2303
        %2305 = vmatprep.subr.mxu0 0.0
        %2306 = vmatpush2.msra.mxu0 0.0
        %2307 = vmatprep.subr.mxu0 0.0
        %2308 = vmatpush2.msra.mxu0 0.0
        %2309 = vmatprep.subr.mxu0 0.0
        %2310 = vmatpush2.msra.mxu0 0.0
        %2311 = vmatprep.subr.mxu0 0.0
        %2312 = vmatpush2.msra.mxu0 0.0
        %2313 = vmatprep.subr.mxu0 0.0
        %2314 = vmatpush2.msra.mxu0 0.0
        %2315 = vmatprep.subr.mxu0 0.0
        %2316 = vmatpush2.msra.mxu0 0.0
        %2317 = vmatprep.subr.mxu0 0.0
        %2318 = vmatpush2.msra.mxu0 0.0
        %2319 = vmatprep.subr.mxu0 0.0
        %2320 = vmatpush2.msra.mxu0 0.0
        %2321 = vmatprep.subr.mxu0 0.0
        %2322 = vmatpush2.msra.mxu0 0.0
        %2323 = vmatprep.subr.mxu0 0.0
        %2324 = vmatpush2.msra.mxu0 0.0
        %2325 = vmatprep.subr.mxu0 0.0
        %2326 = vmatpush2.msra.mxu0 0.0
        %2327 = vmatprep.subr.mxu0 0.0
        %2328 = vmatpush2.msra.mxu0 0.0
        %2329 = vmatprep.subr.mxu0 0.0
        %2330 = vmatpush2.msra.mxu0 0.0
        %2331 = vmatprep.subr.mxu0 0.0
        %2332 = vmatpush2.msra.mxu0 0.0
        %2333 = vmatprep.subr.mxu0 0.0
        %2334 = vmatpush2.msra.mxu0 0.0
        %2335 = vmatprep.subr.mxu0 0.0
        %2336 = vmatpush2.msra.mxu0 0.0
        %2337 = vmatprep.mubr.f32.mxu0 0.0
        %v2338 = vand.u32 %v2109, 4294901760
        %v2339 = vsub.f32 %v2109, %v2338
        %2340 = vmatmul.mubr.f32.gmra.mxu0 %v2339
        %v2341 = vpop.f32.mrf.mxu0
        %v2342 = vadd.f32 %v2266, %v2341
        %v2343 = vpop.f32.mrf.mxu0
        %2344 = vdwg.mxu0
        %2345 = vmatprep.subr.mxu0 0.0
        %2346 = vmatpush1.msra.mxu0 0.0
        %2347 = vmatprep.subr.mxu0 0.0
        %2348 = vmatpush1.msra.mxu0 0.0
        %2349 = vmatprep.subr.mxu0 0.0
        %2350 = vmatpush1.msra.mxu0 0.0
        %2351 = vmatprep.subr.mxu0 0.0
        %2352 = vmatpush1.msra.mxu0 0.0
        %2353 = vmatprep.subr.mxu0 0.0
        %2354 = vmatpush1.msra.mxu0 0.0
        %2355 = vmatprep.subr.mxu0 0.0
        %2356 = vmatpush1.msra.mxu0 0.0
        %2357 = vmatprep.subr.mxu0 0.0
        %2358 = vmatpush1.msra.mxu0 0.0
        %2359 = vmatprep.subr.mxu0 0.0
        %2360 = vmatpush1.msra.mxu0 0.0
        %2361 = vmatprep.subr.mxu0 0.0
        %2362 = vmatpush1.msra.mxu0 0.0
        %2363 = vmatprep.subr.mxu0 0.0
        %2364 = vmatpush1.msra.mxu0 0.0
        %2365 = vmatprep.subr.mxu0 0.0
        %2366 = vmatpush1.msra.mxu0 0.0
        %2367 = vmatprep.subr.mxu0 0.0
        %2368 = vmatpush1.msra.mxu0 0.0
        %2369 = vmatprep.subr.mxu0 0.0
        %2370 = vmatpush1.msra.mxu0 0.0
        %2371 = vmatprep.subr.mxu0 0.0
        %2372 = vmatpush1.msra.mxu0 0.0
        %2373 = vmatprep.subr.mxu0 0.0
        %v2374 = vand.u32 %v251, 4294901760
        %2375 = vmatpush1.msra.mxu0 %v2374
        %2376 = vmatprep.subr.mxu0 0.0
        %v2377 = vand.u32 %v250, 4294901760
        %2378 = vmatpush1.msra.mxu0 %v2377
        %2379 = vmatprep.subr.mxu0 0.0
        %2380 = vmatpush2.msra.mxu0 0.0
        %2381 = vmatprep.subr.mxu0 0.0
        %2382 = vmatpush2.msra.mxu0 0.0
        %2383 = vmatprep.subr.mxu0 0.0
        %2384 = vmatpush2.msra.mxu0 0.0
        %2385 = vmatprep.subr.mxu0 0.0
        %2386 = vmatpush2.msra.mxu0 0.0
        %2387 = vmatprep.subr.mxu0 0.0
        %2388 = vmatpush2.msra.mxu0 0.0
        %2389 = vmatprep.subr.mxu0 0.0
        %2390 = vmatpush2.msra.mxu0 0.0
        %2391 = vmatprep.subr.mxu0 0.0
        %2392 = vmatpush2.msra.mxu0 0.0
        %2393 = vmatprep.subr.mxu0 0.0
        %2394 = vmatpush2.msra.mxu0 0.0
        %2395 = vmatprep.subr.mxu0 0.0
        %2396 = vmatpush2.msra.mxu0 0.0
        %2397 = vmatprep.subr.mxu0 0.0
        %2398 = vmatpush2.msra.mxu0 0.0
        %2399 = vmatprep.subr.mxu0 0.0
        %2400 = vmatpush2.msra.mxu0 0.0
        %2401 = vmatprep.subr.mxu0 0.0
        %2402 = vmatpush2.msra.mxu0 0.0
        %2403 = vmatprep.subr.mxu0 0.0
        %2404 = vmatpush2.msra.mxu0 0.0
        %2405 = vmatprep.subr.mxu0 0.0
        %2406 = vmatpush2.msra.mxu0 0.0
        %2407 = vmatprep.subr.mxu0 0.0
        %2408 = vmatpush2.msra.mxu0 0.0
        %2409 = vmatprep.subr.mxu0 0.0
        %2410 = vmatpush2.msra.mxu0 0.0
        %2411 = vmatprep.mubr.f32.mxu0 0.0
        %v2412 = vand.u32 %v2109, 4294901760
        %v2413 = vsub.f32 %v2109, %v2412
        %v2414 = vand.u32 %v2413, 4294901760
        %2415 = vmatmul.mubr.f32.gmra.mxu0 %v2414
        %v2416 = vpop.f32.mrf.mxu0
        %v2417 = vadd.f32 %v2342, %v2416
        %v2418 = vpop.f32.mrf.mxu0
        %2419 = vdwg.mxu0
        %2420 = vmatprep.subr.mxu0 0.0
        %2421 = vmatpush1.msra.mxu0 0.0
        %2422 = vmatprep.subr.mxu0 0.0
        %2423 = vmatpush1.msra.mxu0 0.0
        %2424 = vmatprep.subr.mxu0 0.0
        %2425 = vmatpush1.msra.mxu0 0.0
        %2426 = vmatprep.subr.mxu0 0.0
        %2427 = vmatpush1.msra.mxu0 0.0
        %2428 = vmatprep.subr.mxu0 0.0
        %2429 = vmatpush1.msra.mxu0 0.0
        %2430 = vmatprep.subr.mxu0 0.0
        %2431 = vmatpush1.msra.mxu0 0.0
        %2432 = vmatprep.subr.mxu0 0.0
        %2433 = vmatpush1.msra.mxu0 0.0
        %2434 = vmatprep.subr.mxu0 0.0
        %2435 = vmatpush1.msra.mxu0 0.0
        %2436 = vmatprep.subr.mxu0 0.0
        %2437 = vmatpush1.msra.mxu0 0.0
        %2438 = vmatprep.subr.mxu0 0.0
        %2439 = vmatpush1.msra.mxu0 0.0
        %2440 = vmatprep.subr.mxu0 0.0
        %2441 = vmatpush1.msra.mxu0 0.0
        %2442 = vmatprep.subr.mxu0 0.0
        %2443 = vmatpush1.msra.mxu0 0.0
        %2444 = vmatprep.subr.mxu0 0.0
        %2445 = vmatpush1.msra.mxu0 0.0
        %2446 = vmatprep.subr.mxu0 0.0
        %2447 = vmatpush1.msra.mxu0 0.0
        %2448 = vmatprep.subr.mxu0 0.0
        %v2449 = vand.u32 %v251, 4294901760
        %v2450 = vsub.f32 %v251, %v2449
        %v2451 = vand.u32 %v2450, 4294901760
        %2452 = vmatpush1.msra.mxu0 %v2451
        %2453 = vmatprep.subr.mxu0 0.0
        %v2454 = vand.u32 %v250, 4294901760
        %v2455 = vsub.f32 %v250, %v2454
        %v2456 = vand.u32 %v2455, 4294901760
        %2457 = vmatpush1.msra.mxu0 %v2456
        %2458 = vmatprep.subr.mxu0 0.0
        %2459 = vmatpush2.msra.mxu0 0.0
        %2460 = vmatprep.subr.mxu0 0.0
        %2461 = vmatpush2.msra.mxu0 0.0
        %2462 = vmatprep.subr.mxu0 0.0
        %2463 = vmatpush2.msra.mxu0 0.0
        %2464 = vmatprep.subr.mxu0 0.0
        %2465 = vmatpush2.msra.mxu0 0.0
        %2466 = vmatprep.subr.mxu0 0.0
        %2467 = vmatpush2.msra.mxu0 0.0
        %2468 = vmatprep.subr.mxu0 0.0
        %2469 = vmatpush2.msra.mxu0 0.0
        %2470 = vmatprep.subr.mxu0 0.0
        %2471 = vmatpush2.msra.mxu0 0.0
        %2472 = vmatprep.subr.mxu0 0.0
        %2473 = vmatpush2.msra.mxu0 0.0
        %2474 = vmatprep.subr.mxu0 0.0
        %2475 = vmatpush2.msra.mxu0 0.0
        %2476 = vmatprep.subr.mxu0 0.0
        %2477 = vmatpush2.msra.mxu0 0.0
        %2478 = vmatprep.subr.mxu0 0.0
        %2479 = vmatpush2.msra.mxu0 0.0
        %2480 = vmatprep.subr.mxu0 0.0
        %2481 = vmatpush2.msra.mxu0 0.0
        %2482 = vmatprep.subr.mxu0 0.0
        %2483 = vmatpush2.msra.mxu0 0.0
        %2484 = vmatprep.subr.mxu0 0.0
        %2485 = vmatpush2.msra.mxu0 0.0
        %2486 = vmatprep.subr.mxu0 0.0
        %2487 = vmatpush2.msra.mxu0 0.0
        %2488 = vmatprep.subr.mxu0 0.0
        %2489 = vmatpush2.msra.mxu0 0.0
        %2490 = vmatprep.mubr.f32.mxu0 0.0
        %v2491 = vand.u32 %v2109, 4294901760
        %2492 = vmatmul.mubr.f32.gmra.mxu0 %v2491
        %v2493 = vpop.f32.mrf.mxu0
        %v2494 = vadd.f32 %v2417, %v2493
        %v2495 = vpop.f32.mrf.mxu0
        %2496 = vdwg.mxu0
        %2497 = vmatprep.subr.mxu0 0.0
        %2498 = vmatpush1.msra.mxu0 0.0
        %2499 = vmatprep.subr.mxu0 0.0
        %2500 = vmatpush1.msra.mxu0 0.0
        %2501 = vmatprep.subr.mxu0 0.0
        %2502 = vmatpush1.msra.mxu0 0.0
        %2503 = vmatprep.subr.mxu0 0.0
        %2504 = vmatpush1.msra.mxu0 0.0
        %2505 = vmatprep.subr.mxu0 0.0
        %2506 = vmatpush1.msra.mxu0 0.0
        %2507 = vmatprep.subr.mxu0 0.0
        %2508 = vmatpush1.msra.mxu0 0.0
        %2509 = vmatprep.subr.mxu0 0.0
        %2510 = vmatpush1.msra.mxu0 0.0
        %2511 = vmatprep.subr.mxu0 0.0
        %2512 = vmatpush1.msra.mxu0 0.0
        %2513 = vmatprep.subr.mxu0 0.0
        %2514 = vmatpush1.msra.mxu0 0.0
        %2515 = vmatprep.subr.mxu0 0.0
        %2516 = vmatpush1.msra.mxu0 0.0
        %2517 = vmatprep.subr.mxu0 0.0
        %2518 = vmatpush1.msra.mxu0 0.0
        %2519 = vmatprep.subr.mxu0 0.0
        %2520 = vmatpush1.msra.mxu0 0.0
        %2521 = vmatprep.subr.mxu0 0.0
        %2522 = vmatpush1.msra.mxu0 0.0
        %2523 = vmatprep.subr.mxu0 0.0
        %2524 = vmatpush1.msra.mxu0 0.0
        %2525 = vmatprep.subr.mxu0 0.0
        %v2526 = vand.u32 %v251, 4294901760
        %2527 = vmatpush1.msra.mxu0 %v2526
        %2528 = vmatprep.subr.mxu0 0.0
        %v2529 = vand.u32 %v250, 4294901760
        %2530 = vmatpush1.msra.mxu0 %v2529
        %2531 = vmatprep.subr.mxu0 0.0
        %2532 = vmatpush2.msra.mxu0 0.0
        %2533 = vmatprep.subr.mxu0 0.0
        %2534 = vmatpush2.msra.mxu0 0.0
        %2535 = vmatprep.subr.mxu0 0.0
        %2536 = vmatpush2.msra.mxu0 0.0
        %2537 = vmatprep.subr.mxu0 0.0
        %2538 = vmatpush2.msra.mxu0 0.0
        %2539 = vmatprep.subr.mxu0 0.0
        %2540 = vmatpush2.msra.mxu0 0.0
        %2541 = vmatprep.subr.mxu0 0.0
        %2542 = vmatpush2.msra.mxu0 0.0
        %2543 = vmatprep.subr.mxu0 0.0
        %2544 = vmatpush2.msra.mxu0 0.0
        %2545 = vmatprep.subr.mxu0 0.0
        %2546 = vmatpush2.msra.mxu0 0.0
        %2547 = vmatprep.subr.mxu0 0.0
        %2548 = vmatpush2.msra.mxu0 0.0
        %2549 = vmatprep.subr.mxu0 0.0
        %2550 = vmatpush2.msra.mxu0 0.0
        %2551 = vmatprep.subr.mxu0 0.0
        %2552 = vmatpush2.msra.mxu0 0.0
        %2553 = vmatprep.subr.mxu0 0.0
        %2554 = vmatpush2.msra.mxu0 0.0
        %2555 = vmatprep.subr.mxu0 0.0
        %2556 = vmatpush2.msra.mxu0 0.0
        %2557 = vmatprep.subr.mxu0 0.0
        %2558 = vmatpush2.msra.mxu0 0.0
        %2559 = vmatprep.subr.mxu0 0.0
        %2560 = vmatpush2.msra.mxu0 0.0
        %2561 = vmatprep.subr.mxu0 0.0
        %2562 = vmatpush2.msra.mxu0 0.0
        %2563 = vmatprep.mubr.f32.mxu0 0.0
        %v2564 = vand.u32 %v2109, 4294901760
        %2565 = vmatmul.mubr.f32.gmra.mxu0 %v2564
        %v2566 = vpop.f32.mrf.mxu0
        %v2567 = vadd.f32 %v2494, %v2566
        %v2568 = vpop.f32.mrf.mxu0
        %2569 = vdwg.mxu0
        %v2570 = vsub.f32 0.0, %v2567
        %v2571 = vmul.f32 %v2570, 1.442695
        %v2572 = vpow.pop %v2571
        %v2573 = vadd.f32 %v2572, 1.0
        %v2574 = vrcp.pop %v2573
        %v2575 = vmul.f32 1.0, %v2574
        %v2576 = vsub.f32 %v1444, %v2051
        %v2577 = vsub.f32 %v1445, %v2052
        %v2578 = vsub.f32 %v1446, %v2053
        %v2579 = vsub.f32 %v1447, %v2054
        %v2580 = vmul.f32 %v2575, %v2576
        %v2581 = vmul.f32 %v2575, %v2577
        %v2582 = vmul.f32 %v2575, %v2578
        %v2583 = vmul.f32 %v2575, %v2579
        %v2584 = vadd.f32 %v2051, %v2580
        %v2585 = vadd.f32 %v2052, %v2581
        %v2586 = vadd.f32 %v2053, %v2582
        %v2587 = vadd.f32 %v2054, %v2583
        %vm2588 = vcmask 64512
        %2589 = vst.msk [vmem:[%s213] sm:$0xff] %vm2588, %v2584
        %2590 = vst.msk [vmem:[%s213 + $0x8] sm:$0xff] %vm2588, %v2585
        %2591 = vst.msk [vmem:[%s213 + $0x10] sm:$0xff] %vm2588, %v2586
        %2592 = vst.msk [vmem:[%s213 + $0x18] sm:$0xff] %vm2588, %v2587
        %s2593 = sand.u32 %s132, 1
        %s2594 = scalar_lea.sflag [#allocation4], %s2593
        %s2595 = sand.u32 %s132, 1
        %s2596 = smul.addr %s2595, 32
        %s2597 = scalar_lea.vmem [#allocation3], %s2596
        // Predicated region
        $region37: #{adaptive_mix_pool.1} parent=35 // pred_check
          %p2598 = pneg %p142
        $region38: #{adaptive_mix_pool.1} parent=35 // pred_check_branch
          %2600 = sbr.rel (%p2598) target = $region40
        $region39: #{adaptive_mix_pool.1} parent=35 // pred_region
          %s2602 = ssub.s32 512, 512
          %2603 = vsyncadd %s2594, %s2602
          %s2604 = smul.addr %s23, 4
          %s2605 = sadd.s32 %s24, %s2604
          %s2606 = smul.addr %s2605, 128
          %s2607 = scalar_lea.hbm %s4, %s2606
          %s2608 = sshll.u32 %s2597, 4
          %s2609 = int_to_ptr.vmem [resolvable:$true] %s2608
          %2614 = dma.vmem_to_hbm [thread:$0]  %s2609, 512, %s2607, %s2594, 128, 128, 8
        $region40: #{adaptive_mix_pool.1} parent=35 // pred_fallthru
          _
      $region36: #{adaptive_mix_pool.1} parent=5 // pred_fallthru
        _
      %p2615 = scmp.le.s32.totalorder 2, %s14
      // Predicated region
      $region41: #{adaptive_mix_pool.1} parent=5 // pred_check
        %p2616 = pneg %p2615
      $region42: #{adaptive_mix_pool.1} parent=5 // pred_check_branch
        %2618 = sbr.rel (%p2616) target = $region44
      $region43: #{adaptive_mix_pool.1} parent=5 // pred_region
        %s2619 = ssub.s32 %s14, 2
        // Predicated region
        $region45: #{adaptive_mix_pool.1} parent=43 // pred_check
          %p2620 = pneg %p148
        $region46: #{adaptive_mix_pool.1} parent=43 // pred_check_branch
          %2622 = sbr.rel (%p2620) target = $region48
        $region47: #{adaptive_mix_pool.1} parent=43 // pred_region
          %s2623 = sand.u32 %s133, 1
          %s2624 = scalar_lea.sflag [#allocation4], %s2623
          %s2625 = sand.u32 %s133, 1
          %s2626 = smul.addr %s2625, 32
          %s2627 = scalar_lea.vmem [#allocation3], %s2626
          %2628 = dma.done %s2624, 512
        $region48: #{adaptive_mix_pool.1} parent=43 // pred_fallthru
          _
      $region44: #{adaptive_mix_pool.1} parent=5 // pred_fallthru
        _
    $region6: #{adaptive_mix_pool.1} parent=1 // loop_footer
      %s18 = sadd.s32 1, %s14
    $region7: #{adaptive_mix_pool.1} parent=1 // loop_footer_branch
      %13 = sbr.rel target = $region3
    $region8: #{adaptive_mix_pool.1} parent=1 // loop_exit
      _
    %2629 = vsyncpa [#allocation4], 1
    %s2630 = scalar_lea.sflag [#allocation4], 1
    %2631 = vsyncpa %s2630, 1

</llo_original>
